<compile_context>
chip_gen: v7x
topology: tpu7x:2x2x1
jax: 0.10.0
libtpu: 0.0.40
codegen_flags: <defaults>
</compile_context>

<pallas_src>
import math

import jax
import jax.numpy as jnp
from jax.experimental import pallas as pl
from jax.experimental.pallas import tpu as pltpu


# ----------------------------- Pallas kernel --------------------------------
def disc_kernel(s_ref, end_ref,
                wi_ref, bi_ref, wh_ref, bhn_ref,
                w1_ref, b1_ref, w2_ref, b2_ref, w3_ref, b3_ref,
                out_ref,
                gi_ref, sel_ref):
    """One batch tile of the full Discriminator forward pass.

    s_ref   : (T, Nb, D)  time-major observations (normalizer folded into wi/bi)
    end_ref : (Nb, 1)     clipped seq_end_frame (int32)
    wi_ref  : (D, 3H)     fused [r|z|n] input weights (RunningMeanStd folded in)
    bi_ref  : (1, 3H)     fused input biases ([bir+bhr | biz+bhz | bin])
    wh_ref  : (H, 3H)     fused [r|z|n] hidden weights
    bhn_ref : (1, H)      hidden bias of the n gate
    w1..w3  : transposed MLP weights; b1..b3 biases
    out_ref : (Nb, 32)
    gi_ref  : VMEM scratch (T, Nb, 3H)  time-major staged input projections
    sel_ref : VMEM scratch (Nb, H)      gathered h_t at the end frame
    """
    T, Nb, D = s_ref.shape
    H = wh_ref.shape[0]

    # Hoisted input projection for all timesteps as one fused GEMM, staged
    # time-major in VMEM scratch (cheap leading-dim loads inside the loop).
    x = s_ref[...].reshape(T * Nb, D)
    gi_ref[...] = (jnp.dot(x, wi_ref[...], preferred_element_type=jnp.float32)
                   + bi_ref[...]).reshape(T, Nb, 3 * H)

    wh = wh_ref[...]
    bhn = bhn_ref[...]
    end = end_ref[...]                          # (Nb, 1) int32, pre-clipped

    # Scratch persists across grid steps -> re-init every invocation.
    sel_ref[...] = jnp.zeros_like(sel_ref)

    h = jnp.zeros((Nb, H), jnp.float32)
    # T is small & static -> fully unrolled.  Serial critical path is a
    # single (Nb,H)@(H,3H) MXU op per step; gate math (lane splits, sigmoid,
    # tanh) is XLU/VPU/EUP filler.
    for t in range(T):
        gi_t = gi_ref[t]                                         # (Nb, 3H)
        gh = jnp.dot(h, wh, preferred_element_type=jnp.float32)  # (Nb, 3H)
        r = jax.nn.sigmoid(gi_t[:, 0:H] + gh[:, 0:H])
        z = jax.nn.sigmoid(gi_t[:, H:2 * H] + gh[:, H:2 * H])
        n = jnp.tanh(gi_t[:, 2 * H:] + r * (gh[:, 2 * H:] + bhn))
        h = (1.0 - z) * n + z * h
        # keep h_t where the (clipped) end frame == t; VMEM-resident so it
        # does not double the loop-carried vreg pressure.
        sel_ref[...] = jnp.where(end == t, h, sel_ref[...])

    # MLP head: Linear -> ReLU -> Linear -> ReLU -> Linear
    y = jnp.maximum(
        jnp.dot(sel_ref[...], w1_ref[...], preferred_element_type=jnp.float32)
        + b1_ref[...], 0.0)
    y = jnp.maximum(
        jnp.dot(y, w2_ref[...], preferred_element_type=jnp.float32)
        + b2_ref[...], 0.0)
    out_ref[...] = (jnp.dot(y, w3_ref[...], preferred_element_type=jnp.float32)
                    + b3_ref[...])


# ------------------------------ wrapper --------------------------------------
_WEIGHT_ORDER = ("wi", "bi", "wh", "bhn", "w1", "b1", "w2", "b2", "w3", "b3")


def _replicated_spec(arr):
    return pl.BlockSpec(arr.shape, lambda i: (0,) * arr.ndim)


def _round_up(x, m):
    return ((x + m - 1) // m) * m


def _pick_tile_n(n):
    """Large enough to amortize ~0.35us/grid-step overhead, small enough to
    give >=2 parallel grid steps for moderate batches (v7x has 2 TCs)."""
    if n <= 8:
        return 8
    half = _round_up((n + 1) // 2, 8)      # >=2 grid steps when possible
    return max(8, min(512, half))


def discriminator_forward(kp, s, seq_end_frame, *, tile_n=None):
    """kp: kernel-ready params (prepare_kernel_params).
    s: (N, T, D) float32; seq_end_frame: (N,) int. Returns (N, 32) float32."""
    N, T, D = s.shape
    H = kp["wh"].shape[0]
    out_dim = kp["w3"].shape[1]

    if tile_n is None:
        tile_n = _pick_tile_n(N)
    tile_n = max(8, _round_up(tile_n, 8))
    n_pad = _round_up(N, tile_n)           # pad batch: keeps the grid tiled
    grid = (n_pad // tile_n,)

    # torch.clip(seq_end_frame, max=T-1); negative indices wrap like PyTorch
    # advanced indexing (s[:, -1] == s[:, T-1]); values PyTorch would raise
    # on (< -T) are clamped into range instead of silently selecting zeros.
    end = jnp.minimum(seq_end_frame.astype(jnp.int32), T - 1)
    end = jnp.where(end < 0, end + T, end)
    end = jnp.clip(end, 0, T - 1).reshape(N, 1)

    # Time-major layout for s: per-step read in the kernel becomes a
    # contiguous leading-dim load instead of a sublane-strided slice.
    s_tm = jnp.transpose(s.astype(jnp.float32), (1, 0, 2))      # (T, N, D)
    if n_pad != N:
        s_tm = jnp.pad(s_tm, ((0, 0), (0, n_pad - N), (0, 0)))
        end = jnp.pad(end, ((0, n_pad - N), (0, 0)))

    in_specs = [
        pl.BlockSpec((T, tile_n, D), lambda i: (0, i, 0)),       # s (tiled)
        pl.BlockSpec((tile_n, 1), lambda i: (i, 0)),             # end (tiled)
    ] + [_replicated_spec(kp[name]) for name in _WEIGHT_ORDER]

    out = pl.pallas_call(
        disc_kernel,
        out_shape=jax.ShapeDtypeStruct((n_pad, out_dim), jnp.float32),
        grid=grid,
        in_specs=in_specs,
        out_specs=pl.BlockSpec((tile_n, out_dim), lambda i: (i, 0)),
        scratch_shapes=[
            pltpu.VMEM((T, tile_n, 3 * H), jnp.float32),   # staged gi
            pltpu.VMEM((tile_n, H), jnp.float32),          # gathered h_t
        ],
        compiler_params=pltpu.CompilerParams(
            dimension_semantics=("parallel",),
            vmem_limit_bytes=32 * 1024 * 1024),
    )(s_tm, end, *(kp[name] for name in _WEIGHT_ORDER))
    return out[:N]


# --------------------------- parameter setup ---------------------------------
def orthogonal_init(key, shape, gain):
    """Matches torch.nn.init.orthogonal_ semantics for 2-D weights."""
    rows, cols = shape
    big, small = max(rows, cols), min(rows, cols)
    a = jax.random.normal(key, (big, small), dtype=jnp.float32)
    q, r = jnp.linalg.qr(a)
    q = q * jnp.sign(jnp.diagonal(r))
    if rows < cols:
        q = q.T
    return gain * q[:rows, :cols]


def make_raw_params(key, disc_dim, latent_dim):
    """PyTorch-equivalent parameters (GRU default init, orthogonal MLP)."""
    D, H = disc_dim, latent_dim
    keys = jax.random.split(key, 7)
    k = 1.0 / math.sqrt(H)
    return dict(
        # RunningMeanStd buffers at their __init__ values (mean=0, var=1)
        mean=jnp.zeros((D,), jnp.float32),
        var=jnp.ones((D,), jnp.float32),
        # GRU: uniform(-1/sqrt(H), 1/sqrt(H)), fused gate order [r, z, n]
        wih=jax.random.uniform(keys[0], (3 * H, D), minval=-k, maxval=k),
        whh=jax.random.uniform(keys[1], (3 * H, H), minval=-k, maxval=k),
        bih=jax.random.uniform(keys[2], (3 * H,), minval=-k, maxval=k),
        bhh=jax.random.uniform(keys[3], (3 * H,), minval=-k, maxval=k),
        # MLP: orthogonal (gains sqrt2, sqrt2, 1), zero biases
        w1=orthogonal_init(keys[4], (256, H), gain=math.sqrt(2.0)),
        w2=orthogonal_init(keys[5], (128, 256), gain=math.sqrt(2.0)),
        w3=orthogonal_init(keys[6], (32, 128), gain=1.0),
        b1=jnp.zeros((256,), jnp.float32),
        b2=jnp.zeros((128,), jnp.float32),
        b3=jnp.zeros((32,), jnp.float32),
    )


def prepare_kernel_params(raw):
    """Fold RunningMeanStd into the GRU input projection, fuse the per-gate
    weights into single (D,3H)/(H,3H) matrices, transpose for `x @ W`.
    NOTE: must be re-run if the running mean/var statistics are updated."""
    mean = raw["mean"].astype(jnp.float32)
    var = raw["var"].astype(jnp.float32)
    inv_std = jax.lax.rsqrt(var + 1e-5)          # RunningMeanStd epsilon
    shift = mean * inv_std                        # (D,)

    H = raw["whh"].shape[1]

    def split3(a):
        return a[0:H], a[H:2 * H], a[2 * H:3 * H]

    wir, wiz, win = split3(raw["wih"])            # (H, D) each
    whr, whz, whn = split3(raw["whh"])            # (H, H) each
    bir, biz, bin_ = split3(raw["bih"])
    bhr, bhz, bhn = split3(raw["bhh"])

    def fold(w, b):
        # (x - mean)*inv_std @ w.T + b  ==  x @ w_f + b_f
        w_t = w.T                                 # (D, H)
        return w_t * inv_std[:, None], b - shift @ w_t

    wir_f, bir_f = fold(wir, bir)
    wiz_f, biz_f = fold(wiz, biz)
    win_f, bin_f = fold(win, bin_)

    wi = jnp.concatenate([wir_f, wiz_f, win_f], axis=1)            # (D, 3H)
    bi = jnp.concatenate([bir_f + bhr, biz_f + bhz, bin_f]).reshape(1, 3 * H)
    wh = jnp.concatenate([whr.T, whz.T, whn.T], axis=1)            # (H, 3H)

    return dict(
        wi=wi, bi=bi, wh=wh, bhn=bhn.reshape(1, H),
        w1=raw["w1"].T, b1=raw["b1"].reshape(1, -1),
        w2=raw["w2"].T, b2=raw["b2"].reshape(1, -1),
        w3=raw["w3"].T, b3=raw["b3"].reshape(1, -1),
    )


# ----------------------- pure-JAX reference (for checking) -------------------
def reference_forward(raw, s, seq_end_frame):
    N, T, D = s.shape
    H = raw["whh"].shape[1]
    hp = jax.lax.Precision.HIGHEST
    x = (s - raw["mean"]) * jax.lax.rsqrt(raw["var"] + 1e-5)
    h = jnp.zeros((N, H), jnp.float32)
    hs = []
    for t in range(T):
        gi = jnp.dot(x[:, t, :], raw["wih"].T, precision=hp) + raw["bih"]
        gh = jnp.dot(h, raw["whh"].T, precision=hp) + raw["bhh"]
        r = jax.nn.sigmoid(gi[:, :H] + gh[:, :H])
        z = jax.nn.sigmoid(gi[:, H:2 * H] + gh[:, H:2 * H])
        n = jnp.tanh(gi[:, 2 * H:] + r * gh[:, 2 * H:])
        h = (1.0 - z) * n + z * h
        hs.append(h)
    hs = jnp.stack(hs, axis=1)                    # (N, T, H)
    end = jnp.minimum(seq_end_frame.astype(jnp.int32), T - 1)
    sel = hs[jnp.arange(N), end]
    y = jnp.maximum(jnp.dot(sel, raw["w1"].T, precision=hp) + raw["b1"], 0.0)
    y = jnp.maximum(jnp.dot(y, raw["w2"].T, precision=hp) + raw["b2"], 0.0)
    return jnp.dot(y, raw["w3"].T, precision=hp) + raw["b3"]


# --------------------------------- main ---------------------------------------
if __name__ == "__main__":
    N, T, DISC_DIM, LATENT_DIM = 2, 8, 8, 32

    root = jax.random.PRNGKey(0)
    k_param, k_s, k_end = jax.random.split(root, 3)

    raw = make_raw_params(k_param, DISC_DIM, LATENT_DIM)
    kparams = prepare_kernel_params(raw)

    s = jax.random.normal(k_s, (N, T, DISC_DIM), dtype=jnp.float32)
    seq_end_frame = jax.random.randint(k_end, (N,), minval=0, maxval=T + 3,
                                       dtype=jnp.int32)   # exercises the clip

    out = discriminator_forward(kparams, s, seq_end_frame)
    out = jax.block_until_ready(out)
    assert out.shape == (N, 32)
    assert bool(jnp.all(jnp.isfinite(out)))

    # sanity check against a pure-JAX reference (loose tol: MXU f32 passes)
    ref = reference_forward(raw, s, seq_end_frame)
    assert bool(jnp.allclose(out, ref, atol=5e-2, rtol=5e-2)), \
        float(jnp.max(jnp.abs(out - ref)))

    print("KERNEL_OK")
</pallas_src>

<mosaic_0001>
module attributes {stable_mosaic.version = 11 : i64} {
  func.func @disc_kernel(%arg0: i32, %arg1: memref<8x8x8xf32, #tpu.memory_space<vmem>>, %arg2: memref<8x1xi32, #tpu.memory_space<vmem>>, %arg3: memref<8x96xf32, #tpu.memory_space<vmem>>, %arg4: memref<1x96xf32, #tpu.memory_space<vmem>>, %arg5: memref<32x96xf32, #tpu.memory_space<vmem>>, %arg6: memref<1x32xf32, #tpu.memory_space<vmem>>, %arg7: memref<32x256xf32, #tpu.memory_space<vmem>>, %arg8: memref<1x256xf32, #tpu.memory_space<vmem>>, %arg9: memref<256x128xf32, #tpu.memory_space<vmem>>, %arg10: memref<1x128xf32, #tpu.memory_space<vmem>>, %arg11: memref<128x32xf32, #tpu.memory_space<vmem>>, %arg12: memref<1x32xf32, #tpu.memory_space<vmem>>, %arg13: memref<8x32xf32, #tpu.memory_space<vmem>>, %arg14: memref<8x8x96xf32, #tpu.memory_space<vmem>>, %arg15: memref<8x32xf32, #tpu.memory_space<vmem>>) attributes {dimension_semantics = [#tpu.dimension_semantics<parallel>], iteration_bounds = array<i64: 1>, scalar_prefetch = 0 : i64, scratch_operands = 2 : i64, tpu.core_type = #tpu.core_type<tc>, window_params = [{transform_indices = @transform_0, window_bounds = array<i64: 8, 8, 8>}, {transform_indices = @transform_1, window_bounds = array<i64: 8, 1>}, {pipeline_mode = #tpu.pipeline_mode<synchronous>, transform_indices = @transform_2, window_bounds = array<i64: 8, 96>}, {pipeline_mode = #tpu.pipeline_mode<synchronous>, transform_indices = @transform_3, window_bounds = array<i64: 1, 96>}, {pipeline_mode = #tpu.pipeline_mode<synchronous>, transform_indices = @transform_4, window_bounds = array<i64: 32, 96>}, {pipeline_mode = #tpu.pipeline_mode<synchronous>, transform_indices = @transform_5, window_bounds = array<i64: 1, 32>}, {pipeline_mode = #tpu.pipeline_mode<synchronous>, transform_indices = @transform_6, window_bounds = array<i64: 32, 256>}, {pipeline_mode = #tpu.pipeline_mode<synchronous>, transform_indices = @transform_7, window_bounds = array<i64: 1, 256>}, {pipeline_mode = #tpu.pipeline_mode<synchronous>, transform_indices = @transform_8, window_bounds = array<i64: 256, 128>}, {pipeline_mode = #tpu.pipeline_mode<synchronous>, transform_indices = @transform_9, window_bounds = array<i64: 1, 128>}, {pipeline_mode = #tpu.pipeline_mode<synchronous>, transform_indices = @transform_10, window_bounds = array<i64: 128, 32>}, {pipeline_mode = #tpu.pipeline_mode<synchronous>, transform_indices = @transform_11, window_bounds = array<i64: 1, 32>}, {transform_indices = @transform_12, window_bounds = array<i64: 8, 32>}]} {
    %c0 = arith.constant 0 : index
    %c0_0 = arith.constant 0 : index
    %c0_1 = arith.constant 0 : index
    %0 = vector.load %arg1[%c0, %c0_0, %c0_1] : memref<8x8x8xf32, #tpu.memory_space<vmem>>, vector<8x8x8xf32>
    %1 = vector.shape_cast %0 : vector<8x8x8xf32> to vector<64x8xf32>
    %c0_2 = arith.constant 0 : index
    %c0_3 = arith.constant 0 : index
    %2 = vector.load %arg3[%c0_2, %c0_3] : memref<8x96xf32, #tpu.memory_space<vmem>>, vector<8x96xf32>
    %cst = arith.constant dense<0.000000e+00> : vector<64x96xf32>
    %3 = tpu.matmul %1, %2, %cst {dimension_numbers = #tpu.dot_dimension_numbers<[1], [0], [0], [1], [0, 0, 1, 1], [], []>} : vector<64x8xf32>, vector<8x96xf32>, vector<64x96xf32> -> vector<64x96xf32>
    %c0_4 = arith.constant 0 : index
    %c0_5 = arith.constant 0 : index
    %4 = vector.load %arg4[%c0_4, %c0_5] : memref<1x96xf32, #tpu.memory_space<vmem>>, vector<1x96xf32>
    %5 = vector.broadcast %4 : vector<1x96xf32> to vector<64x96xf32>
    %6 = arith.addf %3, %5 : vector<64x96xf32>
    %7 = vector.shape_cast %6 : vector<64x96xf32> to vector<8x8x96xf32>
    %c0_6 = arith.constant 0 : index
    %c0_7 = arith.constant 0 : index
    %c0_8 = arith.constant 0 : index
    %8 = vector.load %arg14[%c0_6, %c0_7, %c0_8] : memref<8x8x96xf32, #tpu.memory_space<vmem>>, vector<8x8x96xf32>
    tpu.vector_store %arg14[%c0_6, %c0_7, %c0_8], %7 {strides = array<i32>} : memref<8x8x96xf32, #tpu.memory_space<vmem>>, vector<8x8x96xf32>,
    %c0_9 = arith.constant 0 : index
    %c0_10 = arith.constant 0 : index
    %9 = vector.load %arg5[%c0_9, %c0_10] : memref<32x96xf32, #tpu.memory_space<vmem>>, vector<32x96xf32>
    %c0_11 = arith.constant 0 : index
    %c0_12 = arith.constant 0 : index
    %10 = vector.load %arg6[%c0_11, %c0_12] : memref<1x32xf32, #tpu.memory_space<vmem>>, vector<1x32xf32>
    %c0_13 = arith.constant 0 : index
    %c0_14 = arith.constant 0 : index
    %11 = vector.load %arg2[%c0_13, %c0_14] : memref<8x1xi32, #tpu.memory_space<vmem>>, vector<8x1xi32>
    %cst_15 = arith.constant 0.000000e+00 : f32
    %12 = vector.broadcast %cst_15 : f32 to vector<8x32xf32>
    %c0_16 = arith.constant 0 : index
    %c0_17 = arith.constant 0 : index
    %13 = vector.load %arg15[%c0_16, %c0_17] : memref<8x32xf32, #tpu.memory_space<vmem>>, vector<8x32xf32>
    tpu.vector_store %arg15[%c0_16, %c0_17], %12 {strides = array<i32>} : memref<8x32xf32, #tpu.memory_space<vmem>>, vector<8x32xf32>,
    %cst_18 = arith.constant 0.000000e+00 : f32
    %14 = vector.broadcast %cst_18 : f32 to vector<8x32xf32>
    %c0_19 = arith.constant 0 : index
    %c0_20 = arith.constant 0 : index
    %c0_21 = arith.constant 0 : index
    %15 = vector.load %arg14[%c0_19, %c0_20, %c0_21] : memref<8x8x96xf32, #tpu.memory_space<vmem>>, vector<1x8x96xf32>
    %16 = vector.shape_cast %15 : vector<1x8x96xf32> to vector<8x96xf32>
    %cst_22 = arith.constant dense<0.000000e+00> : vector<8x96xf32>
    %17 = tpu.matmul %14, %9, %cst_22 {dimension_numbers = #tpu.dot_dimension_numbers<[1], [0], [0], [1], [0, 0, 1, 1], [], []>} : vector<8x32xf32>, vector<32x96xf32>, vector<8x96xf32> -> vector<8x96xf32>
    %18 = vector.extract_strided_slice %16 {offsets = [0, 0], sizes = [8, 32], strides = [1, 1]} : vector<8x96xf32> to vector<8x32xf32>
    %19 = vector.extract_strided_slice %17 {offsets = [0, 0], sizes = [8, 32], strides = [1, 1]} : vector<8x96xf32> to vector<8x32xf32>
    %20 = arith.addf %18, %19 : vector<8x32xf32>
    %21 = arith.negf %20 : vector<8x32xf32>
    %22 = math.exp %21 : vector<8x32xf32>
    %cst_23 = arith.constant 1.000000e+00 : f32
    %23 = vector.broadcast %cst_23 : f32 to vector<8x32xf32>
    %24 = arith.addf %23, %22 : vector<8x32xf32>
    %25 = arith.divf %23, %24 : vector<8x32xf32>
    %26 = vector.extract_strided_slice %16 {offsets = [0, 32], sizes = [8, 32], strides = [1, 1]} : vector<8x96xf32> to vector<8x32xf32>
    %27 = vector.extract_strided_slice %17 {offsets = [0, 32], sizes = [8, 32], strides = [1, 1]} : vector<8x96xf32> to vector<8x32xf32>
    %28 = arith.addf %26, %27 : vector<8x32xf32>
    %29 = arith.negf %28 : vector<8x32xf32>
    %30 = math.exp %29 : vector<8x32xf32>
    %cst_24 = arith.constant 1.000000e+00 : f32
    %31 = vector.broadcast %cst_24 : f32 to vector<8x32xf32>
    %32 = arith.addf %31, %30 : vector<8x32xf32>
    %33 = arith.divf %31, %32 : vector<8x32xf32>
    %34 = vector.extract_strided_slice %16 {offsets = [0, 64], sizes = [8, 32], strides = [1, 1]} : vector<8x96xf32> to vector<8x32xf32>
    %35 = vector.extract_strided_slice %17 {offsets = [0, 64], sizes = [8, 32], strides = [1, 1]} : vector<8x96xf32> to vector<8x32xf32>
    %36 = vector.broadcast %10 : vector<1x32xf32> to vector<8x32xf32>
    %37 = arith.addf %35, %36 : vector<8x32xf32>
    %38 = arith.mulf %25, %37 : vector<8x32xf32>
    %39 = arith.addf %34, %38 : vector<8x32xf32>
    %40 = math.tanh %39 : vector<8x32xf32>
    %cst_25 = arith.constant 1.000000e+00 : f32
    %41 = vector.broadcast %cst_25 : f32 to vector<8x32xf32>
    %42 = arith.subf %41, %33 : vector<8x32xf32>
    %43 = arith.mulf %42, %40 : vector<8x32xf32>
    %44 = arith.mulf %33, %14 : vector<8x32xf32>
    %45 = arith.addf %43, %44 : vector<8x32xf32>
    %c0_i32 = arith.constant 0 : i32
    %46 = vector.broadcast %c0_i32 : i32 to vector<8x1xi32>
    %47 = arith.cmpi eq, %11, %46 : vector<8x1xi32>
    %c0_26 = arith.constant 0 : index
    %c0_27 = arith.constant 0 : index
    %48 = vector.load %arg15[%c0_26, %c0_27] : memref<8x32xf32, #tpu.memory_space<vmem>>, vector<8x32xf32>
    %49 = vector.shape_cast %47 : vector<8x1xi1> to vector<8x1xi1>
    %50 = vector.broadcast %49 : vector<8x1xi1> to vector<8x32xi1>
    %51 = arith.select %50, %45, %48 : vector<8x32xi1>, vector<8x32xf32>
    %c0_28 = arith.constant 0 : index
    %c0_29 = arith.constant 0 : index
    %52 = vector.load %arg15[%c0_28, %c0_29] : memref<8x32xf32, #tpu.memory_space<vmem>>, vector<8x32xf32>
    tpu.vector_store %arg15[%c0_28, %c0_29], %51 {strides = array<i32>} : memref<8x32xf32, #tpu.memory_space<vmem>>, vector<8x32xf32>,
    %c1 = arith.constant 1 : index
    %c0_30 = arith.constant 0 : index
    %c0_31 = arith.constant 0 : index
    %53 = vector.load %arg14[%c1, %c0_30, %c0_31] : memref<8x8x96xf32, #tpu.memory_space<vmem>>, vector<1x8x96xf32>
    %54 = vector.shape_cast %53 : vector<1x8x96xf32> to vector<8x96xf32>
    %cst_32 = arith.constant dense<0.000000e+00> : vector<8x96xf32>
    %55 = tpu.matmul %45, %9, %cst_32 {dimension_numbers = #tpu.dot_dimension_numbers<[1], [0], [0], [1], [0, 0, 1, 1], [], []>} : vector<8x32xf32>, vector<32x96xf32>, vector<8x96xf32> -> vector<8x96xf32>
    %56 = vector.extract_strided_slice %54 {offsets = [0, 0], sizes = [8, 32], strides = [1, 1]} : vector<8x96xf32> to vector<8x32xf32>
    %57 = vector.extract_strided_slice %55 {offsets = [0, 0], sizes = [8, 32], strides = [1, 1]} : vector<8x96xf32> to vector<8x32xf32>
    %58 = arith.addf %56, %57 : vector<8x32xf32>
    %59 = arith.negf %58 : vector<8x32xf32>
    %60 = math.exp %59 : vector<8x32xf32>
    %cst_33 = arith.constant 1.000000e+00 : f32
    %61 = vector.broadcast %cst_33 : f32 to vector<8x32xf32>
    %62 = arith.addf %61, %60 : vector<8x32xf32>
    %63 = arith.divf %61, %62 : vector<8x32xf32>
    %64 = vector.extract_strided_slice %54 {offsets = [0, 32], sizes = [8, 32], strides = [1, 1]} : vector<8x96xf32> to vector<8x32xf32>
    %65 = vector.extract_strided_slice %55 {offsets = [0, 32], sizes = [8, 32], strides = [1, 1]} : vector<8x96xf32> to vector<8x32xf32>
    %66 = arith.addf %64, %65 : vector<8x32xf32>
    %67 = arith.negf %66 : vector<8x32xf32>
    %68 = math.exp %67 : vector<8x32xf32>
    %cst_34 = arith.constant 1.000000e+00 : f32
    %69 = vector.broadcast %cst_34 : f32 to vector<8x32xf32>
    %70 = arith.addf %69, %68 : vector<8x32xf32>
    %71 = arith.divf %69, %70 : vector<8x32xf32>
    %72 = vector.extract_strided_slice %54 {offsets = [0, 64], sizes = [8, 32], strides = [1, 1]} : vector<8x96xf32> to vector<8x32xf32>
    %73 = vector.extract_strided_slice %55 {offsets = [0, 64], sizes = [8, 32], strides = [1, 1]} : vector<8x96xf32> to vector<8x32xf32>
    %74 = vector.broadcast %10 : vector<1x32xf32> to vector<8x32xf32>
    %75 = arith.addf %73, %74 : vector<8x32xf32>
    %76 = arith.mulf %63, %75 : vector<8x32xf32>
    %77 = arith.addf %72, %76 : vector<8x32xf32>
    %78 = math.tanh %77 : vector<8x32xf32>
    %cst_35 = arith.constant 1.000000e+00 : f32
    %79 = vector.broadcast %cst_35 : f32 to vector<8x32xf32>
    %80 = arith.subf %79, %71 : vector<8x32xf32>
    %81 = arith.mulf %80, %78 : vector<8x32xf32>
    %82 = arith.mulf %71, %45 : vector<8x32xf32>
    %83 = arith.addf %81, %82 : vector<8x32xf32>
    %c1_i32 = arith.constant 1 : i32
    %84 = vector.broadcast %c1_i32 : i32 to vector<8x1xi32>
    %85 = arith.cmpi eq, %11, %84 : vector<8x1xi32>
    %c0_36 = arith.constant 0 : index
    %c0_37 = arith.constant 0 : index
    %86 = vector.load %arg15[%c0_36, %c0_37] : memref<8x32xf32, #tpu.memory_space<vmem>>, vector<8x32xf32>
    %87 = vector.shape_cast %85 : vector<8x1xi1> to vector<8x1xi1>
    %88 = vector.broadcast %87 : vector<8x1xi1> to vector<8x32xi1>
    %89 = arith.select %88, %83, %86 : vector<8x32xi1>, vector<8x32xf32>
    %c0_38 = arith.constant 0 : index
    %c0_39 = arith.constant 0 : index
    %90 = vector.load %arg15[%c0_38, %c0_39] : memref<8x32xf32, #tpu.memory_space<vmem>>, vector<8x32xf32>
    tpu.vector_store %arg15[%c0_38, %c0_39], %89 {strides = array<i32>} : memref<8x32xf32, #tpu.memory_space<vmem>>, vector<8x32xf32>,
    %c2 = arith.constant 2 : index
    %c0_40 = arith.constant 0 : index
    %c0_41 = arith.constant 0 : index
    %91 = vector.load %arg14[%c2, %c0_40, %c0_41] : memref<8x8x96xf32, #tpu.memory_space<vmem>>, vector<1x8x96xf32>
    %92 = vector.shape_cast %91 : vector<1x8x96xf32> to vector<8x96xf32>
    %cst_42 = arith.constant dense<0.000000e+00> : vector<8x96xf32>
    %93 = tpu.matmul %83, %9, %cst_42 {dimension_numbers = #tpu.dot_dimension_numbers<[1], [0], [0], [1], [0, 0, 1, 1], [], []>} : vector<8x32xf32>, vector<32x96xf32>, vector<8x96xf32> -> vector<8x96xf32>
    %94 = vector.extract_strided_slice %92 {offsets = [0, 0], sizes = [8, 32], strides = [1, 1]} : vector<8x96xf32> to vector<8x32xf32>
    %95 = vector.extract_strided_slice %93 {offsets = [0, 0], sizes = [8, 32], strides = [1, 1]} : vector<8x96xf32> to vector<8x32xf32>
    %96 = arith.addf %94, %95 : vector<8x32xf32>
    %97 = arith.negf %96 : vector<8x32xf32>
    %98 = math.exp %97 : vector<8x32xf32>
    %cst_43 = arith.constant 1.000000e+00 : f32
    %99 = vector.broadcast %cst_43 : f32 to vector<8x32xf32>
    %100 = arith.addf %99, %98 : vector<8x32xf32>
    %101 = arith.divf %99, %100 : vector<8x32xf32>
    %102 = vector.extract_strided_slice %92 {offsets = [0, 32], sizes = [8, 32], strides = [1, 1]} : vector<8x96xf32> to vector<8x32xf32>
    %103 = vector.extract_strided_slice %93 {offsets = [0, 32], sizes = [8, 32], strides = [1, 1]} : vector<8x96xf32> to vector<8x32xf32>
    %104 = arith.addf %102, %103 : vector<8x32xf32>
    %105 = arith.negf %104 : vector<8x32xf32>
    %106 = math.exp %105 : vector<8x32xf32>
    %cst_44 = arith.constant 1.000000e+00 : f32
    %107 = vector.broadcast %cst_44 : f32 to vector<8x32xf32>
    %108 = arith.addf %107, %106 : vector<8x32xf32>
    %109 = arith.divf %107, %108 : vector<8x32xf32>
    %110 = vector.extract_strided_slice %92 {offsets = [0, 64], sizes = [8, 32], strides = [1, 1]} : vector<8x96xf32> to vector<8x32xf32>
    %111 = vector.extract_strided_slice %93 {offsets = [0, 64], sizes = [8, 32], strides = [1, 1]} : vector<8x96xf32> to vector<8x32xf32>
    %112 = vector.broadcast %10 : vector<1x32xf32> to vector<8x32xf32>
    %113 = arith.addf %111, %112 : vector<8x32xf32>
    %114 = arith.mulf %101, %113 : vector<8x32xf32>
    %115 = arith.addf %110, %114 : vector<8x32xf32>
    %116 = math.tanh %115 : vector<8x32xf32>
    %cst_45 = arith.constant 1.000000e+00 : f32
    %117 = vector.broadcast %cst_45 : f32 to vector<8x32xf32>
    %118 = arith.subf %117, %109 : vector<8x32xf32>
    %119 = arith.mulf %118, %116 : vector<8x32xf32>
    %120 = arith.mulf %109, %83 : vector<8x32xf32>
    %121 = arith.addf %119, %120 : vector<8x32xf32>
    %c2_i32 = arith.constant 2 : i32
    %122 = vector.broadcast %c2_i32 : i32 to vector<8x1xi32>
    %123 = arith.cmpi eq, %11, %122 : vector<8x1xi32>
    %c0_46 = arith.constant 0 : index
    %c0_47 = arith.constant 0 : index
    %124 = vector.load %arg15[%c0_46, %c0_47] : memref<8x32xf32, #tpu.memory_space<vmem>>, vector<8x32xf32>
    %125 = vector.shape_cast %123 : vector<8x1xi1> to vector<8x1xi1>
    %126 = vector.broadcast %125 : vector<8x1xi1> to vector<8x32xi1>
    %127 = arith.select %126, %121, %124 : vector<8x32xi1>, vector<8x32xf32>
    %c0_48 = arith.constant 0 : index
    %c0_49 = arith.constant 0 : index
    %128 = vector.load %arg15[%c0_48, %c0_49] : memref<8x32xf32, #tpu.memory_space<vmem>>, vector<8x32xf32>
    tpu.vector_store %arg15[%c0_48, %c0_49], %127 {strides = array<i32>} : memref<8x32xf32, #tpu.memory_space<vmem>>, vector<8x32xf32>,
    %c3 = arith.constant 3 : index
    %c0_50 = arith.constant 0 : index
    %c0_51 = arith.constant 0 : index
    %129 = vector.load %arg14[%c3, %c0_50, %c0_51] : memref<8x8x96xf32, #tpu.memory_space<vmem>>, vector<1x8x96xf32>
    %130 = vector.shape_cast %129 : vector<1x8x96xf32> to vector<8x96xf32>
    %cst_52 = arith.constant dense<0.000000e+00> : vector<8x96xf32>
    %131 = tpu.matmul %121, %9, %cst_52 {dimension_numbers = #tpu.dot_dimension_numbers<[1], [0], [0], [1], [0, 0, 1, 1], [], []>} : vector<8x32xf32>, vector<32x96xf32>, vector<8x96xf32> -> vector<8x96xf32>
    %132 = vector.extract_strided_slice %130 {offsets = [0, 0], sizes = [8, 32], strides = [1, 1]} : vector<8x96xf32> to vector<8x32xf32>
    %133 = vector.extract_strided_slice %131 {offsets = [0, 0], sizes = [8, 32], strides = [1, 1]} : vector<8x96xf32> to vector<8x32xf32>
    %134 = arith.addf %132, %133 : vector<8x32xf32>
    %135 = arith.negf %134 : vector<8x32xf32>
    %136 = math.exp %135 : vector<8x32xf32>
    %cst_53 = arith.constant 1.000000e+00 : f32
    %137 = vector.broadcast %cst_53 : f32 to vector<8x32xf32>
    %138 = arith.addf %137, %136 : vector<8x32xf32>
    %139 = arith.divf %137, %138 : vector<8x32xf32>
    %140 = vector.extract_strided_slice %130 {offsets = [0, 32], sizes = [8, 32], strides = [1, 1]} : vector<8x96xf32> to vector<8x32xf32>
    %141 = vector.extract_strided_slice %131 {offsets = [0, 32], sizes = [8, 32], strides = [1, 1]} : vector<8x96xf32> to vector<8x32xf32>
    %142 = arith.addf %140, %141 : vector<8x32xf32>
    %143 = arith.negf %142 : vector<8x32xf32>
    %144 = math.exp %143 : vector<8x32xf32>
    %cst_54 = arith.constant 1.000000e+00 : f32
    %145 = vector.broadcast %cst_54 : f32 to vector<8x32xf32>
    %146 = arith.addf %145, %144 : vector<8x32xf32>
    %147 = arith.divf %145, %146 : vector<8x32xf32>
    %148 = vector.extract_strided_slice %130 {offsets = [0, 64], sizes = [8, 32], strides = [1, 1]} : vector<8x96xf32> to vector<8x32xf32>
    %149 = vector.extract_strided_slice %131 {offsets = [0, 64], sizes = [8, 32], strides = [1, 1]} : vector<8x96xf32> to vector<8x32xf32>
    %150 = vector.broadcast %10 : vector<1x32xf32> to vector<8x32xf32>
    %151 = arith.addf %149, %150 : vector<8x32xf32>
    %152 = arith.mulf %139, %151 : vector<8x32xf32>
    %153 = arith.addf %148, %152 : vector<8x32xf32>
    %154 = math.tanh %153 : vector<8x32xf32>
    %cst_55 = arith.constant 1.000000e+00 : f32
    %155 = vector.broadcast %cst_55 : f32 to vector<8x32xf32>
    %156 = arith.subf %155, %147 : vector<8x32xf32>
    %157 = arith.mulf %156, %154 : vector<8x32xf32>
    %158 = arith.mulf %147, %121 : vector<8x32xf32>
    %159 = arith.addf %157, %158 : vector<8x32xf32>
    %c3_i32 = arith.constant 3 : i32
    %160 = vector.broadcast %c3_i32 : i32 to vector<8x1xi32>
    %161 = arith.cmpi eq, %11, %160 : vector<8x1xi32>
    %c0_56 = arith.constant 0 : index
    %c0_57 = arith.constant 0 : index
    %162 = vector.load %arg15[%c0_56, %c0_57] : memref<8x32xf32, #tpu.memory_space<vmem>>, vector<8x32xf32>
    %163 = vector.shape_cast %161 : vector<8x1xi1> to vector<8x1xi1>
    %164 = vector.broadcast %163 : vector<8x1xi1> to vector<8x32xi1>
    %165 = arith.select %164, %159, %162 : vector<8x32xi1>, vector<8x32xf32>
    %c0_58 = arith.constant 0 : index
    %c0_59 = arith.constant 0 : index
    %166 = vector.load %arg15[%c0_58, %c0_59] : memref<8x32xf32, #tpu.memory_space<vmem>>, vector<8x32xf32>
    tpu.vector_store %arg15[%c0_58, %c0_59], %165 {strides = array<i32>} : memref<8x32xf32, #tpu.memory_space<vmem>>, vector<8x32xf32>,
    %c4 = arith.constant 4 : index
    %c0_60 = arith.constant 0 : index
    %c0_61 = arith.constant 0 : index
    %167 = vector.load %arg14[%c4, %c0_60, %c0_61] : memref<8x8x96xf32, #tpu.memory_space<vmem>>, vector<1x8x96xf32>
    %168 = vector.shape_cast %167 : vector<1x8x96xf32> to vector<8x96xf32>
    %cst_62 = arith.constant dense<0.000000e+00> : vector<8x96xf32>
    %169 = tpu.matmul %159, %9, %cst_62 {dimension_numbers = #tpu.dot_dimension_numbers<[1], [0], [0], [1], [0, 0, 1, 1], [], []>} : vector<8x32xf32>, vector<32x96xf32>, vector<8x96xf32> -> vector<8x96xf32>
    %170 = vector.extract_strided_slice %168 {offsets = [0, 0], sizes = [8, 32], strides = [1, 1]} : vector<8x96xf32> to vector<8x32xf32>
    %171 = vector.extract_strided_slice %169 {offsets = [0, 0], sizes = [8, 32], strides = [1, 1]} : vector<8x96xf32> to vector<8x32xf32>
    %172 = arith.addf %170, %171 : vector<8x32xf32>
    %173 = arith.negf %172 : vector<8x32xf32>
    %174 = math.exp %173 : vector<8x32xf32>
    %cst_63 = arith.constant 1.000000e+00 : f32
    %175 = vector.broadcast %cst_63 : f32 to vector<8x32xf32>
    %176 = arith.addf %175, %174 : vector<8x32xf32>
    %177 = arith.divf %175, %176 : vector<8x32xf32>
    %178 = vector.extract_strided_slice %168 {offsets = [0, 32], sizes = [8, 32], strides = [1, 1]} : vector<8x96xf32> to vector<8x32xf32>
    %179 = vector.extract_strided_slice %169 {offsets = [0, 32], sizes = [8, 32], strides = [1, 1]} : vector<8x96xf32> to vector<8x32xf32>
    %180 = arith.addf %178, %179 : vector<8x32xf32>
    %181 = arith.negf %180 : vector<8x32xf32>
    %182 = math.exp %181 : vector<8x32xf32>
    %cst_64 = arith.constant 1.000000e+00 : f32
    %183 = vector.broadcast %cst_64 : f32 to vector<8x32xf32>
    %184 = arith.addf %183, %182 : vector<8x32xf32>
    %185 = arith.divf %183, %184 : vector<8x32xf32>
    %186 = vector.extract_strided_slice %168 {offsets = [0, 64], sizes = [8, 32], strides = [1, 1]} : vector<8x96xf32> to vector<8x32xf32>
    %187 = vector.extract_strided_slice %169 {offsets = [0, 64], sizes = [8, 32], strides = [1, 1]} : vector<8x96xf32> to vector<8x32xf32>
    %188 = vector.broadcast %10 : vector<1x32xf32> to vector<8x32xf32>
    %189 = arith.addf %187, %188 : vector<8x32xf32>
    %190 = arith.mulf %177, %189 : vector<8x32xf32>
    %191 = arith.addf %186, %190 : vector<8x32xf32>
    %192 = math.tanh %191 : vector<8x32xf32>
    %cst_65 = arith.constant 1.000000e+00 : f32
    %193 = vector.broadcast %cst_65 : f32 to vector<8x32xf32>
    %194 = arith.subf %193, %185 : vector<8x32xf32>
    %195 = arith.mulf %194, %192 : vector<8x32xf32>
    %196 = arith.mulf %185, %159 : vector<8x32xf32>
    %197 = arith.addf %195, %196 : vector<8x32xf32>
    %c4_i32 = arith.constant 4 : i32
    %198 = vector.broadcast %c4_i32 : i32 to vector<8x1xi32>
    %199 = arith.cmpi eq, %11, %198 : vector<8x1xi32>
    %c0_66 = arith.constant 0 : index
    %c0_67 = arith.constant 0 : index
    %200 = vector.load %arg15[%c0_66, %c0_67] : memref<8x32xf32, #tpu.memory_space<vmem>>, vector<8x32xf32>
    %201 = vector.shape_cast %199 : vector<8x1xi1> to vector<8x1xi1>
    %202 = vector.broadcast %201 : vector<8x1xi1> to vector<8x32xi1>
    %203 = arith.select %202, %197, %200 : vector<8x32xi1>, vector<8x32xf32>
    %c0_68 = arith.constant 0 : index
    %c0_69 = arith.constant 0 : index
    %204 = vector.load %arg15[%c0_68, %c0_69] : memref<8x32xf32, #tpu.memory_space<vmem>>, vector<8x32xf32>
    tpu.vector_store %arg15[%c0_68, %c0_69], %203 {strides = array<i32>} : memref<8x32xf32, #tpu.memory_space<vmem>>, vector<8x32xf32>,
    %c5 = arith.constant 5 : index
    %c0_70 = arith.constant 0 : index
    %c0_71 = arith.constant 0 : index
    %205 = vector.load %arg14[%c5, %c0_70, %c0_71] : memref<8x8x96xf32, #tpu.memory_space<vmem>>, vector<1x8x96xf32>
    %206 = vector.shape_cast %205 : vector<1x8x96xf32> to vector<8x96xf32>
    %cst_72 = arith.constant dense<0.000000e+00> : vector<8x96xf32>
    %207 = tpu.matmul %197, %9, %cst_72 {dimension_numbers = #tpu.dot_dimension_numbers<[1], [0], [0], [1], [0, 0, 1, 1], [], []>} : vector<8x32xf32>, vector<32x96xf32>, vector<8x96xf32> -> vector<8x96xf32>
    %208 = vector.extract_strided_slice %206 {offsets = [0, 0], sizes = [8, 32], strides = [1, 1]} : vector<8x96xf32> to vector<8x32xf32>
    %209 = vector.extract_strided_slice %207 {offsets = [0, 0], sizes = [8, 32], strides = [1, 1]} : vector<8x96xf32> to vector<8x32xf32>
    %210 = arith.addf %208, %209 : vector<8x32xf32>
    %211 = arith.negf %210 : vector<8x32xf32>
    %212 = math.exp %211 : vector<8x32xf32>
    %cst_73 = arith.constant 1.000000e+00 : f32
    %213 = vector.broadcast %cst_73 : f32 to vector<8x32xf32>
    %214 = arith.addf %213, %212 : vector<8x32xf32>
    %215 = arith.divf %213, %214 : vector<8x32xf32>
    %216 = vector.extract_strided_slice %206 {offsets = [0, 32], sizes = [8, 32], strides = [1, 1]} : vector<8x96xf32> to vector<8x32xf32>
    %217 = vector.extract_strided_slice %207 {offsets = [0, 32], sizes = [8, 32], strides = [1, 1]} : vector<8x96xf32> to vector<8x32xf32>
    %218 = arith.addf %216, %217 : vector<8x32xf32>
    %219 = arith.negf %218 : vector<8x32xf32>
    %220 = math.exp %219 : vector<8x32xf32>
    %cst_74 = arith.constant 1.000000e+00 : f32
    %221 = vector.broadcast %cst_74 : f32 to vector<8x32xf32>
    %222 = arith.addf %221, %220 : vector<8x32xf32>
    %223 = arith.divf %221, %222 : vector<8x32xf32>
    %224 = vector.extract_strided_slice %206 {offsets = [0, 64], sizes = [8, 32], strides = [1, 1]} : vector<8x96xf32> to vector<8x32xf32>
    %225 = vector.extract_strided_slice %207 {offsets = [0, 64], sizes = [8, 32], strides = [1, 1]} : vector<8x96xf32> to vector<8x32xf32>
    %226 = vector.broadcast %10 : vector<1x32xf32> to vector<8x32xf32>
    %227 = arith.addf %225, %226 : vector<8x32xf32>
    %228 = arith.mulf %215, %227 : vector<8x32xf32>
    %229 = arith.addf %224, %228 : vector<8x32xf32>
    %230 = math.tanh %229 : vector<8x32xf32>
    %cst_75 = arith.constant 1.000000e+00 : f32
    %231 = vector.broadcast %cst_75 : f32 to vector<8x32xf32>
    %232 = arith.subf %231, %223 : vector<8x32xf32>
    %233 = arith.mulf %232, %230 : vector<8x32xf32>
    %234 = arith.mulf %223, %197 : vector<8x32xf32>
    %235 = arith.addf %233, %234 : vector<8x32xf32>
    %c5_i32 = arith.constant 5 : i32
    %236 = vector.broadcast %c5_i32 : i32 to vector<8x1xi32>
    %237 = arith.cmpi eq, %11, %236 : vector<8x1xi32>
    %c0_76 = arith.constant 0 : index
    %c0_77 = arith.constant 0 : index
    %238 = vector.load %arg15[%c0_76, %c0_77] : memref<8x32xf32, #tpu.memory_space<vmem>>, vector<8x32xf32>
    %239 = vector.shape_cast %237 : vector<8x1xi1> to vector<8x1xi1>
    %240 = vector.broadcast %239 : vector<8x1xi1> to vector<8x32xi1>
    %241 = arith.select %240, %235, %238 : vector<8x32xi1>, vector<8x32xf32>
    %c0_78 = arith.constant 0 : index
    %c0_79 = arith.constant 0 : index
    %242 = vector.load %arg15[%c0_78, %c0_79] : memref<8x32xf32, #tpu.memory_space<vmem>>, vector<8x32xf32>
    tpu.vector_store %arg15[%c0_78, %c0_79], %241 {strides = array<i32>} : memref<8x32xf32, #tpu.memory_space<vmem>>, vector<8x32xf32>,
    %c6 = arith.constant 6 : index
    %c0_80 = arith.constant 0 : index
    %c0_81 = arith.constant 0 : index
    %243 = vector.load %arg14[%c6, %c0_80, %c0_81] : memref<8x8x96xf32, #tpu.memory_space<vmem>>, vector<1x8x96xf32>
    %244 = vector.shape_cast %243 : vector<1x8x96xf32> to vector<8x96xf32>
    %cst_82 = arith.constant dense<0.000000e+00> : vector<8x96xf32>
    %245 = tpu.matmul %235, %9, %cst_82 {dimension_numbers = #tpu.dot_dimension_numbers<[1], [0], [0], [1], [0, 0, 1, 1], [], []>} : vector<8x32xf32>, vector<32x96xf32>, vector<8x96xf32> -> vector<8x96xf32>
    %246 = vector.extract_strided_slice %244 {offsets = [0, 0], sizes = [8, 32], strides = [1, 1]} : vector<8x96xf32> to vector<8x32xf32>
    %247 = vector.extract_strided_slice %245 {offsets = [0, 0], sizes = [8, 32], strides = [1, 1]} : vector<8x96xf32> to vector<8x32xf32>
    %248 = arith.addf %246, %247 : vector<8x32xf32>
    %249 = arith.negf %248 : vector<8x32xf32>
    %250 = math.exp %249 : vector<8x32xf32>
    %cst_83 = arith.constant 1.000000e+00 : f32
    %251 = vector.broadcast %cst_83 : f32 to vector<8x32xf32>
    %252 = arith.addf %251, %250 : vector<8x32xf32>
    %253 = arith.divf %251, %252 : vector<8x32xf32>
    %254 = vector.extract_strided_slice %244 {offsets = [0, 32], sizes = [8, 32], strides = [1, 1]} : vector<8x96xf32> to vector<8x32xf32>
    %255 = vector.extract_strided_slice %245 {offsets = [0, 32], sizes = [8, 32], strides = [1, 1]} : vector<8x96xf32> to vector<8x32xf32>
    %256 = arith.addf %254, %255 : vector<8x32xf32>
    %257 = arith.negf %256 : vector<8x32xf32>
    %258 = math.exp %257 : vector<8x32xf32>
    %cst_84 = arith.constant 1.000000e+00 : f32
    %259 = vector.broadcast %cst_84 : f32 to vector<8x32xf32>
    %260 = arith.addf %259, %258 : vector<8x32xf32>
    %261 = arith.divf %259, %260 : vector<8x32xf32>
    %262 = vector.extract_strided_slice %244 {offsets = [0, 64], sizes = [8, 32], strides = [1, 1]} : vector<8x96xf32> to vector<8x32xf32>
    %263 = vector.extract_strided_slice %245 {offsets = [0, 64], sizes = [8, 32], strides = [1, 1]} : vector<8x96xf32> to vector<8x32xf32>
    %264 = vector.broadcast %10 : vector<1x32xf32> to vector<8x32xf32>
    %265 = arith.addf %263, %264 : vector<8x32xf32>
    %266 = arith.mulf %253, %265 : vector<8x32xf32>
    %267 = arith.addf %262, %266 : vector<8x32xf32>
    %268 = math.tanh %267 : vector<8x32xf32>
    %cst_85 = arith.constant 1.000000e+00 : f32
    %269 = vector.broadcast %cst_85 : f32 to vector<8x32xf32>
    %270 = arith.subf %269, %261 : vector<8x32xf32>
    %271 = arith.mulf %270, %268 : vector<8x32xf32>
    %272 = arith.mulf %261, %235 : vector<8x32xf32>
    %273 = arith.addf %271, %272 : vector<8x32xf32>
    %c6_i32 = arith.constant 6 : i32
    %274 = vector.broadcast %c6_i32 : i32 to vector<8x1xi32>
    %275 = arith.cmpi eq, %11, %274 : vector<8x1xi32>
    %c0_86 = arith.constant 0 : index
    %c0_87 = arith.constant 0 : index
    %276 = vector.load %arg15[%c0_86, %c0_87] : memref<8x32xf32, #tpu.memory_space<vmem>>, vector<8x32xf32>
    %277 = vector.shape_cast %275 : vector<8x1xi1> to vector<8x1xi1>
    %278 = vector.broadcast %277 : vector<8x1xi1> to vector<8x32xi1>
    %279 = arith.select %278, %273, %276 : vector<8x32xi1>, vector<8x32xf32>
    %c0_88 = arith.constant 0 : index
    %c0_89 = arith.constant 0 : index
    %280 = vector.load %arg15[%c0_88, %c0_89] : memref<8x32xf32, #tpu.memory_space<vmem>>, vector<8x32xf32>
    tpu.vector_store %arg15[%c0_88, %c0_89], %279 {strides = array<i32>} : memref<8x32xf32, #tpu.memory_space<vmem>>, vector<8x32xf32>,
    %c7 = arith.constant 7 : index
    %c0_90 = arith.constant 0 : index
    %c0_91 = arith.constant 0 : index
    %281 = vector.load %arg14[%c7, %c0_90, %c0_91] : memref<8x8x96xf32, #tpu.memory_space<vmem>>, vector<1x8x96xf32>
    %282 = vector.shape_cast %281 : vector<1x8x96xf32> to vector<8x96xf32>
    %cst_92 = arith.constant dense<0.000000e+00> : vector<8x96xf32>
    %283 = tpu.matmul %273, %9, %cst_92 {dimension_numbers = #tpu.dot_dimension_numbers<[1], [0], [0], [1], [0, 0, 1, 1], [], []>} : vector<8x32xf32>, vector<32x96xf32>, vector<8x96xf32> -> vector<8x96xf32>
    %284 = vector.extract_strided_slice %282 {offsets = [0, 0], sizes = [8, 32], strides = [1, 1]} : vector<8x96xf32> to vector<8x32xf32>
    %285 = vector.extract_strided_slice %283 {offsets = [0, 0], sizes = [8, 32], strides = [1, 1]} : vector<8x96xf32> to vector<8x32xf32>
    %286 = arith.addf %284, %285 : vector<8x32xf32>
    %287 = arith.negf %286 : vector<8x32xf32>
    %288 = math.exp %287 : vector<8x32xf32>
    %cst_93 = arith.constant 1.000000e+00 : f32
    %289 = vector.broadcast %cst_93 : f32 to vector<8x32xf32>
    %290 = arith.addf %289, %288 : vector<8x32xf32>
    %291 = arith.divf %289, %290 : vector<8x32xf32>
    %292 = vector.extract_strided_slice %282 {offsets = [0, 32], sizes = [8, 32], strides = [1, 1]} : vector<8x96xf32> to vector<8x32xf32>
    %293 = vector.extract_strided_slice %283 {offsets = [0, 32], sizes = [8, 32], strides = [1, 1]} : vector<8x96xf32> to vector<8x32xf32>
    %294 = arith.addf %292, %293 : vector<8x32xf32>
    %295 = arith.negf %294 : vector<8x32xf32>
    %296 = math.exp %295 : vector<8x32xf32>
    %cst_94 = arith.constant 1.000000e+00 : f32
    %297 = vector.broadcast %cst_94 : f32 to vector<8x32xf32>
    %298 = arith.addf %297, %296 : vector<8x32xf32>
    %299 = arith.divf %297, %298 : vector<8x32xf32>
    %300 = vector.extract_strided_slice %282 {offsets = [0, 64], sizes = [8, 32], strides = [1, 1]} : vector<8x96xf32> to vector<8x32xf32>
    %301 = vector.extract_strided_slice %283 {offsets = [0, 64], sizes = [8, 32], strides = [1, 1]} : vector<8x96xf32> to vector<8x32xf32>
    %302 = vector.broadcast %10 : vector<1x32xf32> to vector<8x32xf32>
    %303 = arith.addf %301, %302 : vector<8x32xf32>
    %304 = arith.mulf %291, %303 : vector<8x32xf32>
    %305 = arith.addf %300, %304 : vector<8x32xf32>
    %306 = math.tanh %305 : vector<8x32xf32>
    %cst_95 = arith.constant 1.000000e+00 : f32
    %307 = vector.broadcast %cst_95 : f32 to vector<8x32xf32>
    %308 = arith.subf %307, %299 : vector<8x32xf32>
    %309 = arith.mulf %308, %306 : vector<8x32xf32>
    %310 = arith.mulf %299, %273 : vector<8x32xf32>
    %311 = arith.addf %309, %310 : vector<8x32xf32>
    %c7_i32 = arith.constant 7 : i32
    %312 = vector.broadcast %c7_i32 : i32 to vector<8x1xi32>
    %313 = arith.cmpi eq, %11, %312 : vector<8x1xi32>
    %c0_96 = arith.constant 0 : index
    %c0_97 = arith.constant 0 : index
    %314 = vector.load %arg15[%c0_96, %c0_97] : memref<8x32xf32, #tpu.memory_space<vmem>>, vector<8x32xf32>
    %315 = vector.shape_cast %313 : vector<8x1xi1> to vector<8x1xi1>
    %316 = vector.broadcast %315 : vector<8x1xi1> to vector<8x32xi1>
    %317 = arith.select %316, %311, %314 : vector<8x32xi1>, vector<8x32xf32>
    %c0_98 = arith.constant 0 : index
    %c0_99 = arith.constant 0 : index
    %318 = vector.load %arg15[%c0_98, %c0_99] : memref<8x32xf32, #tpu.memory_space<vmem>>, vector<8x32xf32>
    tpu.vector_store %arg15[%c0_98, %c0_99], %317 {strides = array<i32>} : memref<8x32xf32, #tpu.memory_space<vmem>>, vector<8x32xf32>,
    %c0_100 = arith.constant 0 : index
    %c0_101 = arith.constant 0 : index
    %319 = vector.load %arg15[%c0_100, %c0_101] : memref<8x32xf32, #tpu.memory_space<vmem>>, vector<8x32xf32>
    %c0_102 = arith.constant 0 : index
    %c0_103 = arith.constant 0 : index
    %320 = vector.load %arg7[%c0_102, %c0_103] : memref<32x256xf32, #tpu.memory_space<vmem>>, vector<32x256xf32>
    %cst_104 = arith.constant dense<0.000000e+00> : vector<8x256xf32>
    %321 = tpu.matmul %319, %320, %cst_104 {dimension_numbers = #tpu.dot_dimension_numbers<[1], [0], [0], [1], [0, 0, 1, 1], [], []>} : vector<8x32xf32>, vector<32x256xf32>, vector<8x256xf32> -> vector<8x256xf32>
    %c0_105 = arith.constant 0 : index
    %c0_106 = arith.constant 0 : index
    %322 = vector.load %arg8[%c0_105, %c0_106] : memref<1x256xf32, #tpu.memory_space<vmem>>, vector<1x256xf32>
    %323 = vector.broadcast %322 : vector<1x256xf32> to vector<8x256xf32>
    %324 = arith.addf %321, %323 : vector<8x256xf32>
    %cst_107 = arith.constant 0.000000e+00 : f32
    %325 = vector.broadcast %cst_107 : f32 to vector<8x256xf32>
    %326 = arith.maximumf %324, %325 : vector<8x256xf32>
    %c0_108 = arith.constant 0 : index
    %c0_109 = arith.constant 0 : index
    %327 = vector.load %arg9[%c0_108, %c0_109] : memref<256x128xf32, #tpu.memory_space<vmem>>, vector<256x128xf32>
    %cst_110 = arith.constant dense<0.000000e+00> : vector<8x128xf32>
    %328 = tpu.matmul %326, %327, %cst_110 {dimension_numbers = #tpu.dot_dimension_numbers<[1], [0], [0], [1], [0, 0, 1, 1], [], []>} : vector<8x256xf32>, vector<256x128xf32>, vector<8x128xf32> -> vector<8x128xf32>
    %c0_111 = arith.constant 0 : index
    %c0_112 = arith.constant 0 : index
    %329 = vector.load %arg10[%c0_111, %c0_112] : memref<1x128xf32, #tpu.memory_space<vmem>>, vector<1x128xf32>
    %330 = vector.broadcast %329 : vector<1x128xf32> to vector<8x128xf32>
    %331 = arith.addf %328, %330 : vector<8x128xf32>
    %cst_113 = arith.constant 0.000000e+00 : f32
    %332 = vector.broadcast %cst_113 : f32 to vector<8x128xf32>
    %333 = arith.maximumf %331, %332 : vector<8x128xf32>
    %c0_114 = arith.constant 0 : index
    %c0_115 = arith.constant 0 : index
    %334 = vector.load %arg11[%c0_114, %c0_115] : memref<128x32xf32, #tpu.memory_space<vmem>>, vector<128x32xf32>
    %cst_116 = arith.constant dense<0.000000e+00> : vector<8x32xf32>
    %335 = tpu.matmul %333, %334, %cst_116 {dimension_numbers = #tpu.dot_dimension_numbers<[1], [0], [0], [1], [0, 0, 1, 1], [], []>} : vector<8x128xf32>, vector<128x32xf32>, vector<8x32xf32> -> vector<8x32xf32>
    %c0_117 = arith.constant 0 : index
    %c0_118 = arith.constant 0 : index
    %336 = vector.load %arg12[%c0_117, %c0_118] : memref<1x32xf32, #tpu.memory_space<vmem>>, vector<1x32xf32>
    %337 = vector.broadcast %336 : vector<1x32xf32> to vector<8x32xf32>
    %338 = arith.addf %335, %337 : vector<8x32xf32>
    %c0_119 = arith.constant 0 : index
    %c0_120 = arith.constant 0 : index
    %339 = vector.load %arg13[%c0_119, %c0_120] : memref<8x32xf32, #tpu.memory_space<vmem>>, vector<8x32xf32>
    tpu.vector_store %arg13[%c0_119, %c0_120], %338 {strides = array<i32>} : memref<8x32xf32, #tpu.memory_space<vmem>>, vector<8x32xf32>,
    return
  }
  func.func @transform_0(%arg0: i32) -> (i32, i32, i32) {
    %c0_i32 = arith.constant 0 : i32
    %c0_i32_0 = arith.constant 0 : i32
    %c0_i32_1 = arith.constant 0 : i32
    return %c0_i32, %arg0, %c0_i32_0 : i32, i32, i32
  }
  func.func @transform_1(%arg0: i32) -> (i32, i32) {
    %c0_i32 = arith.constant 0 : i32
    %c0_i32_0 = arith.constant 0 : i32
    return %arg0, %c0_i32 : i32, i32
  }
  func.func @transform_2(%arg0: i32) -> (i32, i32) {
    %c0_i32 = arith.constant 0 : i32
    %c0_i32_0 = arith.constant 0 : i32
    %c0_i32_1 = arith.constant 0 : i32
    return %c0_i32, %c0_i32_0 : i32, i32
  }
  func.func @transform_3(%arg0: i32) -> (i32, i32) {
    %c0_i32 = arith.constant 0 : i32
    %c0_i32_0 = arith.constant 0 : i32
    %c0_i32_1 = arith.constant 0 : i32
    return %c0_i32, %c0_i32_0 : i32, i32
  }
  func.func @transform_4(%arg0: i32) -> (i32, i32) {
    %c0_i32 = arith.constant 0 : i32
    %c0_i32_0 = arith.constant 0 : i32
    %c0_i32_1 = arith.constant 0 : i32
    return %c0_i32, %c0_i32_0 : i32, i32
  }
  func.func @transform_5(%arg0: i32) -> (i32, i32) {
    %c0_i32 = arith.constant 0 : i32
    %c0_i32_0 = arith.constant 0 : i32
    %c0_i32_1 = arith.constant 0 : i32
    return %c0_i32, %c0_i32_0 : i32, i32
  }
  func.func @transform_6(%arg0: i32) -> (i32, i32) {
    %c0_i32 = arith.constant 0 : i32
    %c0_i32_0 = arith.constant 0 : i32
    %c0_i32_1 = arith.constant 0 : i32
    return %c0_i32, %c0_i32_0 : i32, i32
  }
  func.func @transform_7(%arg0: i32) -> (i32, i32) {
    %c0_i32 = arith.constant 0 : i32
    %c0_i32_0 = arith.constant 0 : i32
    %c0_i32_1 = arith.constant 0 : i32
    return %c0_i32, %c0_i32_0 : i32, i32
  }
  func.func @transform_8(%arg0: i32) -> (i32, i32) {
    %c0_i32 = arith.constant 0 : i32
    %c0_i32_0 = arith.constant 0 : i32
    %c0_i32_1 = arith.constant 0 : i32
    return %c0_i32, %c0_i32_0 : i32, i32
  }
  func.func @transform_9(%arg0: i32) -> (i32, i32) {
    %c0_i32 = arith.constant 0 : i32
    %c0_i32_0 = arith.constant 0 : i32
    %c0_i32_1 = arith.constant 0 : i32
    return %c0_i32, %c0_i32_0 : i32, i32
  }
  func.func @transform_10(%arg0: i32) -> (i32, i32) {
    %c0_i32 = arith.constant 0 : i32
    %c0_i32_0 = arith.constant 0 : i32
    %c0_i32_1 = arith.constant 0 : i32
    return %c0_i32, %c0_i32_0 : i32, i32
  }
  func.func @transform_11(%arg0: i32) -> (i32, i32) {
    %c0_i32 = arith.constant 0 : i32
    %c0_i32_0 = arith.constant 0 : i32
    %c0_i32_1 = arith.constant 0 : i32
    return %c0_i32, %c0_i32_0 : i32, i32
  }
  func.func @transform_12(%arg0: i32) -> (i32, i32) {
    %c0_i32 = arith.constant 0 : i32
    %c0_i32_0 = arith.constant 0 : i32
    return %arg0, %c0_i32 : i32, i32
  }
}

</mosaic_0001>

<llo_original>
// kernel: tpu_custom_call.1
$region0: #{tpu_custom_call.1}
  #allocation0 [shape = 'u32[]', space=smem, size = 0x4, offset = 0x4, fixed_abs, tag = 'smem constant byte address 0x4 - core index']
  #allocation1 [shape = 'u32[144,128]{1,0:T(1,128)}', space=vmem, size = 0x12000, scoped, tag = 'internal scratch']
  #allocation2 [shape = 'f32[8,8,96]{2,1,0:T(8,128)}', space=vmem, size = 0x8000, scoped, tag = 'scratch operand']
  #allocation3 [shape = 'f32[8,32]{1,0:T(8,128)}', space=vmem, size = 0x1000, scoped, tag = 'scratch operand']
  %s0 = inlined_call_operand.vmem [shape: f32[8,8,8], index: 0, kind: input, shape index: {}]
  %s1 = inlined_call_operand.vmem [shape: s32[8,1], index: 1, kind: input, shape index: {}]
  %s2 = inlined_call_operand.vmem [shape: f32[8,96], index: 2, kind: input, shape index: {}]
  %s3 = inlined_call_operand.vmem [shape: f32[1,96], index: 3, kind: input, shape index: {}]
  %s4 = inlined_call_operand.vmem [shape: f32[32,96], index: 4, kind: input, shape index: {}]
  %s5 = inlined_call_operand.vmem [shape: f32[1,32], index: 5, kind: input, shape index: {}]
  %s6 = inlined_call_operand.vmem [shape: f32[32,256], index: 6, kind: input, shape index: {}]
  %s7 = inlined_call_operand.vmem [shape: f32[1,256], index: 7, kind: input, shape index: {}]
  %s8 = inlined_call_operand.hbm [shape: f32[256,128], index: 8, kind: input, shape index: {}]
  %s9 = inlined_call_operand.vmem [shape: f32[1,128], index: 9, kind: input, shape index: {}]
  %s10 = inlined_call_operand.vmem [shape: f32[128,32], index: 10, kind: input, shape index: {}]
  %s11 = inlined_call_operand.vmem [shape: f32[1,32], index: 11, kind: input, shape index: {}]
  %s12 = inlined_call_operand.hbm [shape: f32[8,32], index: 12, kind: output, shape index: {}]
  %s13 = sld [smem:[#allocation0]]
  $region62: #{tpu_custom_call.1} parent=0
    _
  %s15 = ssub.s32 1, %s13
  %s16 = scalar_select 0, %s15, %s13
  $region1: #{tpu_custom_call.1} parent=0
    #allocation4 [shape = 'u8[131072]{0}', space=vmem, size = 0x20000, scoped, tag = 'input window, operand 8, single buffered']
    #allocation5 [shape = 's32[1]{0}', space=sflag, size = 0x4, scoped, tag = 'scoped memory for tpu_custom_call.1']
    #allocation6 [shape = 's32[1]{0}', space=sflag, size = 0x4, scoped, tag = 'scoped memory for tpu_custom_call.1']
    #allocation7 [shape = 'u8[4096]{0}', space=vmem, size = 0x1000, scoped, tag = 'output window, operand 0, single buffered']
    %17 = vsyncpa [#allocation5], 0
    %18 = vsyncpa [#allocation6], 0
    // Predicated region
    $region2: #{tpu_custom_call.1} parent=1 // pred_check
      _
    $region3: #{tpu_custom_call.1} parent=1 // pred_check_branch
      %20 = sbr.rel (0) target = $region5
    $region4: #{tpu_custom_call.1} parent=1 // pred_region
      _
    $region5: #{tpu_custom_call.1} parent=1 // pred_fallthru
      _
    // Predicated region
    $region6: #{tpu_custom_call.1} parent=1 // pred_check
      _
    $region7: #{tpu_custom_call.1} parent=1 // pred_check_branch
      %22 = sbr.rel (0) target = $region9
    $region8: #{tpu_custom_call.1} parent=1 // pred_region
      _
    $region9: #{tpu_custom_call.1} parent=1 // pred_fallthru
      _
    // Predicated region
    $region10: #{tpu_custom_call.1} parent=1 // pred_check
      _
    $region11: #{tpu_custom_call.1} parent=1 // pred_check_branch
      %24 = sbr.rel (0) target = $region13
    $region12: #{tpu_custom_call.1} parent=1 // pred_region
      _
    $region13: #{tpu_custom_call.1} parent=1 // pred_fallthru
      _
    // Predicated region
    $region14: #{tpu_custom_call.1} parent=1 // pred_check
      _
    $region15: #{tpu_custom_call.1} parent=1 // pred_check_branch
      %26 = sbr.rel (0) target = $region17
    $region16: #{tpu_custom_call.1} parent=1 // pred_region
      _
    $region17: #{tpu_custom_call.1} parent=1 // pred_fallthru
      _
    // Predicated region
    $region18: #{tpu_custom_call.1} parent=1 // pred_check
      _
    $region19: #{tpu_custom_call.1} parent=1 // pred_check_branch
      %28 = sbr.rel (0) target = $region21
    $region20: #{tpu_custom_call.1} parent=1 // pred_region
      _
    $region21: #{tpu_custom_call.1} parent=1 // pred_fallthru
      _
    // Predicated region
    $region22: #{tpu_custom_call.1} parent=1 // pred_check
      _
    $region23: #{tpu_custom_call.1} parent=1 // pred_check_branch
      %30 = sbr.rel (0) target = $region25
    $region24: #{tpu_custom_call.1} parent=1 // pred_region
      _
    $region25: #{tpu_custom_call.1} parent=1 // pred_fallthru
      _
    // Predicated region
    $region26: #{tpu_custom_call.1} parent=1 // pred_check
      _
    $region27: #{tpu_custom_call.1} parent=1 // pred_check_branch
      %32 = sbr.rel (0) target = $region29
    $region28: #{tpu_custom_call.1} parent=1 // pred_region
      _
    $region29: #{tpu_custom_call.1} parent=1 // pred_fallthru
      _
    // Predicated region
    $region30: #{tpu_custom_call.1} parent=1 // pred_check
      _
    $region31: #{tpu_custom_call.1} parent=1 // pred_check_branch
      %34 = sbr.rel (0) target = $region33
    $region32: #{tpu_custom_call.1} parent=1 // pred_region
      _
    $region33: #{tpu_custom_call.1} parent=1 // pred_fallthru
      _
    // Predicated region
    $region34: #{tpu_custom_call.1} parent=1 // pred_check
      _
    $region35: #{tpu_custom_call.1} parent=1 // pred_check_branch
      %36 = sbr.rel (0) target = $region37
    $region36: #{tpu_custom_call.1} parent=1 // pred_region
      %s38 = ssub.s32 4096, 4096
      %39 = vsyncadd [#allocation5], %s38
      %s40 = sshll.u32 [#allocation4], 4
      %s41 = int_to_ptr.vmem [resolvable:$true] %s40
      %46 = dma.hbm_to_vmem [thread:$0]  %s8, 4096, %s41, [#allocation5], 128, 128, 8
    $region37: #{tpu_custom_call.1} parent=1 // pred_fallthru
      _
    // Predicated region
    $region38: #{tpu_custom_call.1} parent=1 // pred_check
      _
    $region39: #{tpu_custom_call.1} parent=1 // pred_check_branch
      %48 = sbr.rel (0) target = $region41
    $region40: #{tpu_custom_call.1} parent=1 // pred_region
      _
    $region41: #{tpu_custom_call.1} parent=1 // pred_fallthru
      _
    // Predicated region
    $region42: #{tpu_custom_call.1} parent=1 // pred_check
      _
    $region43: #{tpu_custom_call.1} parent=1 // pred_check_branch
      %50 = sbr.rel (0) target = $region45
    $region44: #{tpu_custom_call.1} parent=1 // pred_region
      _
    $region45: #{tpu_custom_call.1} parent=1 // pred_fallthru
      _
    // Predicated region
    $region46: #{tpu_custom_call.1} parent=1 // pred_check
      _
    $region47: #{tpu_custom_call.1} parent=1 // pred_check_branch
      %52 = sbr.rel (0) target = $region49
    $region48: #{tpu_custom_call.1} parent=1 // pred_region
      _
    $region49: #{tpu_custom_call.1} parent=1 // pred_fallthru
      _
    // Predicated region
    $region50: #{tpu_custom_call.1} parent=1 // pred_check
      _
    $region51: #{tpu_custom_call.1} parent=1 // pred_check_branch
      %54 = sbr.rel (0) target = $region53
    $region52: #{tpu_custom_call.1} parent=1 // pred_region
      %55 = dma.done [#allocation5], 4096
    $region53: #{tpu_custom_call.1} parent=1 // pred_fallthru
      _
    %v56 = vld [vmem:[%s0] sm:$0xff]
    %v57 = vld [vmem:[%s0 + $0x8] sm:$0xff]
    %v58 = vld [vmem:[%s0 + $0x10] sm:$0xff]
    %v59 = vld [vmem:[%s0 + $0x18] sm:$0xff]
    %v60 = vld [vmem:[%s0 + $0x20] sm:$0xff]
    %v61 = vld [vmem:[%s0 + $0x28] sm:$0xff]
    %v62 = vld [vmem:[%s0 + $0x30] sm:$0xff]
    %v63 = vld [vmem:[%s0 + $0x38] sm:$0xff]
    %v64 = vld [vmem:[%s2] sm:$0xff]
    %v65 = vld [vmem:[%s3] sm:$0x1]
    %v67 = vlaneseq
    %v68 = vshrl.u32 %v67, 7
    %v69 = vsub.s32 0, %v68
    %v70 = vrot.slane %v65, %v69
    %vm72 = vcmask 64512
    %v74 = vsel %vm72, %v56, 0
    %v77 = vsel %vm72, %v57, 0
    %v80 = vsel %vm72, %v58, 0
    %v83 = vsel %vm72, %v59, 0
    %v86 = vsel %vm72, %v60, 0
    %v89 = vsel %vm72, %v61, 0
    %v92 = vsel %vm72, %v62, 0
    %v95 = vsel %vm72, %v63, 0
    %97 = vmatprep.subr.mxu0 0.0
    %98 = vmatpush1.msra.mxu0 %v64
    %99 = vmatprep.subr.mxu0 0.0
    %100 = vmatpush1.msra.mxu0 0.0
    %101 = vmatprep.subr.mxu0 0.0
    %102 = vmatpush1.msra.mxu0 0.0
    %103 = vmatprep.subr.mxu0 0.0
    %104 = vmatpush1.msra.mxu0 0.0
    %105 = vmatprep.subr.mxu0 0.0
    %106 = vmatpush1.msra.mxu0 0.0
    %107 = vmatprep.subr.mxu0 0.0
    %108 = vmatpush1.msra.mxu0 0.0
    %109 = vmatprep.subr.mxu0 0.0
    %110 = vmatpush1.msra.mxu0 0.0
    %111 = vmatprep.subr.mxu0 0.0
    %112 = vmatpush1.msra.mxu0 0.0
    %113 = vmatprep.subr.mxu0 0.0
    %114 = vmatpush1.msra.mxu0 0.0
    %115 = vmatprep.subr.mxu0 0.0
    %116 = vmatpush1.msra.mxu0 0.0
    %117 = vmatprep.subr.mxu0 0.0
    %118 = vmatpush1.msra.mxu0 0.0
    %119 = vmatprep.subr.mxu0 0.0
    %120 = vmatpush1.msra.mxu0 0.0
    %121 = vmatprep.subr.mxu0 0.0
    %122 = vmatpush1.msra.mxu0 0.0
    %123 = vmatprep.subr.mxu0 0.0
    %124 = vmatpush1.msra.mxu0 0.0
    %125 = vmatprep.subr.mxu0 0.0
    %126 = vmatpush1.msra.mxu0 0.0
    %127 = vmatprep.subr.mxu0 0.0
    %128 = vmatpush1.msra.mxu0 0.0
    %129 = vmatprep.subr.mxu0 0.0
    %130 = vmatpush1.msra.mxu0 0.0
    %131 = vmatprep.subr.mxu0 0.0
    %132 = vmatpush1.msra.mxu0 0.0
    %133 = vmatprep.subr.mxu0 0.0
    %134 = vmatpush1.msra.mxu0 0.0
    %135 = vmatprep.subr.mxu0 0.0
    %136 = vmatpush1.msra.mxu0 0.0
    %137 = vmatprep.subr.mxu0 0.0
    %138 = vmatpush1.msra.mxu0 0.0
    %139 = vmatprep.subr.mxu0 0.0
    %140 = vmatpush1.msra.mxu0 0.0
    %141 = vmatprep.subr.mxu0 0.0
    %142 = vmatpush1.msra.mxu0 0.0
    %143 = vmatprep.subr.mxu0 0.0
    %144 = vmatpush1.msra.mxu0 0.0
    %145 = vmatprep.subr.mxu0 0.0
    %146 = vmatpush1.msra.mxu0 0.0
    %147 = vmatprep.subr.mxu0 0.0
    %148 = vmatpush1.msra.mxu0 0.0
    %149 = vmatprep.subr.mxu0 0.0
    %150 = vmatpush1.msra.mxu0 0.0
    %151 = vmatprep.subr.mxu0 0.0
    %152 = vmatpush1.msra.mxu0 0.0
    %153 = vmatprep.subr.mxu0 0.0
    %154 = vmatpush1.msra.mxu0 0.0
    %155 = vmatprep.subr.mxu0 0.0
    %156 = vmatpush1.msra.mxu0 0.0
    %157 = vmatprep.subr.mxu0 0.0
    %158 = vmatpush1.msra.mxu0 0.0
    %159 = vmatprep.subr.mxu0 0.0
    %160 = vmatpush1.msra.mxu0 0.0
    %161 = vmatprep.mubr.f32.mxu0 0.0
    %162 = vmatmul.mubr.f32.gmra.mrb[0].mxu0 %v74
    %v163 = vpop.f32.mrb[0].mxu0
    %v164 = vadd.f32 %v70, %v163
    %v165 = vpop.f32.mrb[0].mxu0
    %166 = vmatprep.mubr.f32.mxu0 0.0
    %167 = vmatmul.mubr.f32.gmra.mrb[0].mxu0 %v77
    %v168 = vpop.f32.mrb[0].mxu0
    %v169 = vadd.f32 %v70, %v168
    %v170 = vpop.f32.mrb[0].mxu0
    %171 = vmatprep.mubr.f32.mxu0 0.0
    %172 = vmatmul.mubr.f32.gmra.mrb[0].mxu0 %v80
    %v173 = vpop.f32.mrb[0].mxu0
    %v174 = vadd.f32 %v70, %v173
    %v175 = vpop.f32.mrb[0].mxu0
    %176 = vmatprep.mubr.f32.mxu0 0.0
    %177 = vmatmul.mubr.f32.gmra.mrb[0].mxu0 %v83
    %v178 = vpop.f32.mrb[0].mxu0
    %v179 = vadd.f32 %v70, %v178
    %v180 = vpop.f32.mrb[0].mxu0
    %181 = vmatprep.mubr.f32.mxu0 0.0
    %182 = vmatmul.mubr.f32.gmra.mrb[0].mxu0 %v86
    %v183 = vpop.f32.mrb[0].mxu0
    %v184 = vadd.f32 %v70, %v183
    %v185 = vpop.f32.mrb[0].mxu0
    %186 = vmatprep.mubr.f32.mxu0 0.0
    %187 = vmatmul.mubr.f32.gmra.mrb[0].mxu0 %v89
    %v188 = vpop.f32.mrb[0].mxu0
    %v189 = vadd.f32 %v70, %v188
    %v190 = vpop.f32.mrb[0].mxu0
    %191 = vmatprep.mubr.f32.mxu0 0.0
    %192 = vmatmul.mubr.f32.gmra.mrb[0].mxu0 %v92
    %v193 = vpop.f32.mrb[0].mxu0
    %v194 = vadd.f32 %v70, %v193
    %v195 = vpop.f32.mrb[0].mxu0
    %196 = vmatprep.mubr.f32.mxu0 0.0
    %197 = vmatmul.mubr.f32.gmra.mrb[0].mxu0 %v95
    %v198 = vpop.f32.mrb[0].mxu0
    %v199 = vadd.f32 %v70, %v198
    %v200 = vpop.f32.mrb[0].mxu0
    %201 = vdwg.mxu0
    %vm202 = vcmask 785408
    %203 = vst.msk [vmem:[#allocation2] sm:$0xff] %vm202, %v164
    %204 = vst.msk [vmem:[#allocation2 + $0x8] sm:$0xff] %vm202, %v169
    %205 = vst.msk [vmem:[#allocation2 + $0x10] sm:$0xff] %vm202, %v174
    %206 = vst.msk [vmem:[#allocation2 + $0x18] sm:$0xff] %vm202, %v179
    %207 = vst.msk [vmem:[#allocation2 + $0x20] sm:$0xff] %vm202, %v184
    %208 = vst.msk [vmem:[#allocation2 + $0x28] sm:$0xff] %vm202, %v189
    %209 = vst.msk [vmem:[#allocation2 + $0x30] sm:$0xff] %vm202, %v194
    %210 = vst.msk [vmem:[#allocation2 + $0x38] sm:$0xff] %vm202, %v199
    %v211 = vld [vmem:[%s4] sm:$0xff]
    %v212 = vld [vmem:[%s4 + $0x8] sm:$0xff]
    %v213 = vld [vmem:[%s4 + $0x10] sm:$0xff]
    %v214 = vld [vmem:[%s4 + $0x18] sm:$0xff]
    %v215 = vld [vmem:[%s5] sm:$0x1]
    %v216 = vld [vmem:[%s1] sm:$0xff]
    %vm217 = vcmask 261120
    %218 = vst.msk [vmem:[#allocation3] sm:$0xff] %vm217, 0.0
    %v219 = vld [vmem:[#allocation2] sm:$0xff]
    %v221 = vsel %vm217, 0.0, 0
    %223 = vmatprep.subr.mxu0 0.0
    %224 = vmatpush1.msra.mxu0 %v211
    %225 = vmatprep.subr.mxu0 0.0
    %226 = vmatpush1.msra.mxu0 %v212
    %227 = vmatprep.subr.mxu0 0.0
    %228 = vmatpush1.msra.mxu0 %v213
    %229 = vmatprep.subr.mxu0 0.0
    %230 = vmatpush1.msra.mxu0 %v214
    %231 = vmatprep.subr.mxu0 0.0
    %232 = vmatpush1.msra.mxu0 0.0
    %233 = vmatprep.subr.mxu0 0.0
    %234 = vmatpush1.msra.mxu0 0.0
    %235 = vmatprep.subr.mxu0 0.0
    %236 = vmatpush1.msra.mxu0 0.0
    %237 = vmatprep.subr.mxu0 0.0
    %238 = vmatpush1.msra.mxu0 0.0
    %239 = vmatprep.subr.mxu0 0.0
    %240 = vmatpush1.msra.mxu0 0.0
    %241 = vmatprep.subr.mxu0 0.0
    %242 = vmatpush1.msra.mxu0 0.0
    %243 = vmatprep.subr.mxu0 0.0
    %244 = vmatpush1.msra.mxu0 0.0
    %245 = vmatprep.subr.mxu0 0.0
    %246 = vmatpush1.msra.mxu0 0.0
    %247 = vmatprep.subr.mxu0 0.0
    %248 = vmatpush1.msra.mxu0 0.0
    %249 = vmatprep.subr.mxu0 0.0
    %250 = vmatpush1.msra.mxu0 0.0
    %251 = vmatprep.subr.mxu0 0.0
    %252 = vmatpush1.msra.mxu0 0.0
    %253 = vmatprep.subr.mxu0 0.0
    %254 = vmatpush1.msra.mxu0 0.0
    %255 = vmatprep.subr.mxu0 0.0
    %256 = vmatpush1.msra.mxu0 0.0
    %257 = vmatprep.subr.mxu0 0.0
    %258 = vmatpush1.msra.mxu0 0.0
    %259 = vmatprep.subr.mxu0 0.0
    %260 = vmatpush1.msra.mxu0 0.0
    %261 = vmatprep.subr.mxu0 0.0
    %262 = vmatpush1.msra.mxu0 0.0
    %263 = vmatprep.subr.mxu0 0.0
    %264 = vmatpush1.msra.mxu0 0.0
    %265 = vmatprep.subr.mxu0 0.0
    %266 = vmatpush1.msra.mxu0 0.0
    %267 = vmatprep.subr.mxu0 0.0
    %268 = vmatpush1.msra.mxu0 0.0
    %269 = vmatprep.subr.mxu0 0.0
    %270 = vmatpush1.msra.mxu0 0.0
    %271 = vmatprep.subr.mxu0 0.0
    %272 = vmatpush1.msra.mxu0 0.0
    %273 = vmatprep.subr.mxu0 0.0
    %274 = vmatpush1.msra.mxu0 0.0
    %275 = vmatprep.subr.mxu0 0.0
    %276 = vmatpush1.msra.mxu0 0.0
    %277 = vmatprep.subr.mxu0 0.0
    %278 = vmatpush1.msra.mxu0 0.0
    %279 = vmatprep.subr.mxu0 0.0
    %280 = vmatpush1.msra.mxu0 0.0
    %281 = vmatprep.subr.mxu0 0.0
    %282 = vmatpush1.msra.mxu0 0.0
    %283 = vmatprep.subr.mxu0 0.0
    %284 = vmatpush1.msra.mxu0 0.0
    %285 = vmatprep.subr.mxu0 0.0
    %286 = vmatpush1.msra.mxu0 0.0
    %287 = vmatprep.mubr.f32.mxu0 0.0
    %288 = vmatmul.mubr.f32.gmra.mrb[0].mxu0 %v221
    %v289 = vpop.f32.mrb[0].mxu0
    %v290 = vadd.f32 0.0, %v289
    %v291 = vpop.f32.mrb[0].mxu0
    %292 = vdwg.mxu0
    %v293 = vadd.f32 %v219, %v290
    %v294 = vxor.u32 %v293, 2147483648
    %v295 = vmul.f32 %v294, 1.442695
    %v296 = vpow.pop %v295
    %v297 = vadd.f32 %v296, 1.0
    %v298 = vrcp.pop %v297
    %v299 = vmul.f32 1.0, %v298
    %v301 = vlaneseq
    %v302 = vshrl.u32 %v301, 7
    %v303 = vsub.s32 0, %v302
    %v304 = vrot.slane %v215, %v303
    %305 = vrot.lane.b32.xlu0 %v304, 64
    %v306 = vpop.permute.xlu0 %305
    %v308 = vadd.f32 %v290, %v306
    %310 = vrot.lane.b32.xlu0 %v308, 64
    %v311 = vpop.permute.xlu0 %310
    %v313 = vmul.f32 %v299, %v311
    %315 = vrot.lane.b32.xlu0 %v313, 64
    %v316 = vpop.permute.xlu0 %315
    %v318 = vadd.f32 %v219, %v316
    %v319 = vtanh.pop %v318
    %v320 = vsub.f32 1.0, %v299
    %322 = vrot.lane.b32.xlu0 %v319, 96
    %v323 = vpop.permute.xlu0 %322
    %v325 = vmul.f32 %v320, %v323
    %v326 = vmul.f32 %v299, 0.0
    %v327 = vadd.f32 %v325, %v326
    %vm328 = vcmp.eq.s32.totalorder %v216, 0
    %v329 = vld [vmem:[#allocation3] sm:$0xff]
    %v330 = vsel %vm328, 1, 0
    %331 = vset.pattern.permute.xlu0 0
    %332 = vperm.xlu0 %331, %v330
    %v333 = vpop.permute.xlu0 %332
    %vm334 = vcmp.eq.s32.totalorder %v333, 1
    %336 = vrot.lane.b32.xlu0 %v329, 32
    %v337 = vpop.permute.xlu0 %336
    %v339 = vsel %vm334, %v327, %v337
    %341 = vrot.lane.b32.xlu0 %v339, 96
    %v342 = vpop.permute.xlu0 %341
    %344 = vst.msk [vmem:[#allocation3] sm:$0xff] %vm217, %v342
    %s345 = scalar_lea.vmem [#allocation2], 8
    %v346 = vld [vmem:[%s345] sm:$0xff]
    %348 = vrot.lane.b32.xlu0 %v327, 96
    %v349 = vpop.permute.xlu0 %348
    %v350 = vsel %vm217, %v349, 0
    %352 = vmatprep.subr.mxu0 0.0
    %353 = vmatpush1.msra.mxu0 %v211
    %354 = vmatprep.subr.mxu0 0.0
    %355 = vmatpush1.msra.mxu0 %v212
    %356 = vmatprep.subr.mxu0 0.0
    %357 = vmatpush1.msra.mxu0 %v213
    %358 = vmatprep.subr.mxu0 0.0
    %359 = vmatpush1.msra.mxu0 %v214
    %360 = vmatprep.subr.mxu0 0.0
    %361 = vmatpush1.msra.mxu0 0.0
    %362 = vmatprep.subr.mxu0 0.0
    %363 = vmatpush1.msra.mxu0 0.0
    %364 = vmatprep.subr.mxu0 0.0
    %365 = vmatpush1.msra.mxu0 0.0
    %366 = vmatprep.subr.mxu0 0.0
    %367 = vmatpush1.msra.mxu0 0.0
    %368 = vmatprep.subr.mxu0 0.0
    %369 = vmatpush1.msra.mxu0 0.0
    %370 = vmatprep.subr.mxu0 0.0
    %371 = vmatpush1.msra.mxu0 0.0
    %372 = vmatprep.subr.mxu0 0.0
    %373 = vmatpush1.msra.mxu0 0.0
    %374 = vmatprep.subr.mxu0 0.0
    %375 = vmatpush1.msra.mxu0 0.0
    %376 = vmatprep.subr.mxu0 0.0
    %377 = vmatpush1.msra.mxu0 0.0
    %378 = vmatprep.subr.mxu0 0.0
    %379 = vmatpush1.msra.mxu0 0.0
    %380 = vmatprep.subr.mxu0 0.0
    %381 = vmatpush1.msra.mxu0 0.0
    %382 = vmatprep.subr.mxu0 0.0
    %383 = vmatpush1.msra.mxu0 0.0
    %384 = vmatprep.subr.mxu0 0.0
    %385 = vmatpush1.msra.mxu0 0.0
    %386 = vmatprep.subr.mxu0 0.0
    %387 = vmatpush1.msra.mxu0 0.0
    %388 = vmatprep.subr.mxu0 0.0
    %389 = vmatpush1.msra.mxu0 0.0
    %390 = vmatprep.subr.mxu0 0.0
    %391 = vmatpush1.msra.mxu0 0.0
    %392 = vmatprep.subr.mxu0 0.0
    %393 = vmatpush1.msra.mxu0 0.0
    %394 = vmatprep.subr.mxu0 0.0
    %395 = vmatpush1.msra.mxu0 0.0
    %396 = vmatprep.subr.mxu0 0.0
    %397 = vmatpush1.msra.mxu0 0.0
    %398 = vmatprep.subr.mxu0 0.0
    %399 = vmatpush1.msra.mxu0 0.0
    %400 = vmatprep.subr.mxu0 0.0
    %401 = vmatpush1.msra.mxu0 0.0
    %402 = vmatprep.subr.mxu0 0.0
    %403 = vmatpush1.msra.mxu0 0.0
    %404 = vmatprep.subr.mxu0 0.0
    %405 = vmatpush1.msra.mxu0 0.0
    %406 = vmatprep.subr.mxu0 0.0
    %407 = vmatpush1.msra.mxu0 0.0
    %408 = vmatprep.subr.mxu0 0.0
    %409 = vmatpush1.msra.mxu0 0.0
    %410 = vmatprep.subr.mxu0 0.0
    %411 = vmatpush1.msra.mxu0 0.0
    %412 = vmatprep.subr.mxu0 0.0
    %413 = vmatpush1.msra.mxu0 0.0
    %414 = vmatprep.subr.mxu0 0.0
    %415 = vmatpush1.msra.mxu0 0.0
    %416 = vmatprep.mubr.f32.mxu0 0.0
    %417 = vmatmul.mubr.f32.gmra.mrb[0].mxu0 %v350
    %v418 = vpop.f32.mrb[0].mxu0
    %v419 = vadd.f32 0.0, %v418
    %v420 = vpop.f32.mrb[0].mxu0
    %421 = vdwg.mxu0
    %v422 = vadd.f32 %v346, %v419
    %v423 = vxor.u32 %v422, 2147483648
    %v424 = vmul.f32 %v423, 1.442695
    %v425 = vpow.pop %v424
    %v426 = vadd.f32 %v425, 1.0
    %v427 = vrcp.pop %v426
    %v428 = vmul.f32 1.0, %v427
    %v429 = vadd.f32 %v419, %v306
    %431 = vrot.lane.b32.xlu0 %v429, 64
    %v432 = vpop.permute.xlu0 %431
    %v434 = vmul.f32 %v428, %v432
    %436 = vrot.lane.b32.xlu0 %v434, 64
    %v437 = vpop.permute.xlu0 %436
    %v439 = vadd.f32 %v346, %v437
    %v440 = vtanh.pop %v439
    %v441 = vsub.f32 1.0, %v428
    %443 = vrot.lane.b32.xlu0 %v440, 96
    %v444 = vpop.permute.xlu0 %443
    %v446 = vmul.f32 %v441, %v444
    %v447 = vmul.f32 %v428, %v327
    %v448 = vadd.f32 %v446, %v447
    %vm449 = vcmp.eq.s32.totalorder %v216, 1
    %v450 = vld [vmem:[#allocation3] sm:$0xff]
    %v451 = vsel %vm449, 1, 0
    %452 = vset.pattern.permute.xlu0 0
    %453 = vperm.xlu0 %452, %v451
    %v454 = vpop.permute.xlu0 %453
    %vm455 = vcmp.eq.s32.totalorder %v454, 1
    %457 = vrot.lane.b32.xlu0 %v450, 32
    %v458 = vpop.permute.xlu0 %457
    %v460 = vsel %vm455, %v448, %v458
    %462 = vrot.lane.b32.xlu0 %v460, 96
    %v463 = vpop.permute.xlu0 %462
    %465 = vst.msk [vmem:[#allocation3] sm:$0xff] %vm217, %v463
    %s466 = scalar_lea.vmem [#allocation2], 16
    %v467 = vld [vmem:[%s466] sm:$0xff]
    %469 = vrot.lane.b32.xlu0 %v448, 96
    %v470 = vpop.permute.xlu0 %469
    %v471 = vsel %vm217, %v470, 0
    %473 = vmatprep.subr.mxu0 0.0
    %474 = vmatpush1.msra.mxu0 %v211
    %475 = vmatprep.subr.mxu0 0.0
    %476 = vmatpush1.msra.mxu0 %v212
    %477 = vmatprep.subr.mxu0 0.0
    %478 = vmatpush1.msra.mxu0 %v213
    %479 = vmatprep.subr.mxu0 0.0
    %480 = vmatpush1.msra.mxu0 %v214
    %481 = vmatprep.subr.mxu0 0.0
    %482 = vmatpush1.msra.mxu0 0.0
    %483 = vmatprep.subr.mxu0 0.0
    %484 = vmatpush1.msra.mxu0 0.0
    %485 = vmatprep.subr.mxu0 0.0
    %486 = vmatpush1.msra.mxu0 0.0
    %487 = vmatprep.subr.mxu0 0.0
    %488 = vmatpush1.msra.mxu0 0.0
    %489 = vmatprep.subr.mxu0 0.0
    %490 = vmatpush1.msra.mxu0 0.0
    %491 = vmatprep.subr.mxu0 0.0
    %492 = vmatpush1.msra.mxu0 0.0
    %493 = vmatprep.subr.mxu0 0.0
    %494 = vmatpush1.msra.mxu0 0.0
    %495 = vmatprep.subr.mxu0 0.0
    %496 = vmatpush1.msra.mxu0 0.0
    %497 = vmatprep.subr.mxu0 0.0
    %498 = vmatpush1.msra.mxu0 0.0
    %499 = vmatprep.subr.mxu0 0.0
    %500 = vmatpush1.msra.mxu0 0.0
    %501 = vmatprep.subr.mxu0 0.0
    %502 = vmatpush1.msra.mxu0 0.0
    %503 = vmatprep.subr.mxu0 0.0
    %504 = vmatpush1.msra.mxu0 0.0
    %505 = vmatprep.subr.mxu0 0.0
    %506 = vmatpush1.msra.mxu0 0.0
    %507 = vmatprep.subr.mxu0 0.0
    %508 = vmatpush1.msra.mxu0 0.0
    %509 = vmatprep.subr.mxu0 0.0
    %510 = vmatpush1.msra.mxu0 0.0
    %511 = vmatprep.subr.mxu0 0.0
    %512 = vmatpush1.msra.mxu0 0.0
    %513 = vmatprep.subr.mxu0 0.0
    %514 = vmatpush1.msra.mxu0 0.0
    %515 = vmatprep.subr.mxu0 0.0
    %516 = vmatpush1.msra.mxu0 0.0
    %517 = vmatprep.subr.mxu0 0.0
    %518 = vmatpush1.msra.mxu0 0.0
    %519 = vmatprep.subr.mxu0 0.0
    %520 = vmatpush1.msra.mxu0 0.0
    %521 = vmatprep.subr.mxu0 0.0
    %522 = vmatpush1.msra.mxu0 0.0
    %523 = vmatprep.subr.mxu0 0.0
    %524 = vmatpush1.msra.mxu0 0.0
    %525 = vmatprep.subr.mxu0 0.0
    %526 = vmatpush1.msra.mxu0 0.0
    %527 = vmatprep.subr.mxu0 0.0
    %528 = vmatpush1.msra.mxu0 0.0
    %529 = vmatprep.subr.mxu0 0.0
    %530 = vmatpush1.msra.mxu0 0.0
    %531 = vmatprep.subr.mxu0 0.0
    %532 = vmatpush1.msra.mxu0 0.0
    %533 = vmatprep.subr.mxu0 0.0
    %534 = vmatpush1.msra.mxu0 0.0
    %535 = vmatprep.subr.mxu0 0.0
    %536 = vmatpush1.msra.mxu0 0.0
    %537 = vmatprep.mubr.f32.mxu0 0.0
    %538 = vmatmul.mubr.f32.gmra.mrb[0].mxu0 %v471
    %v539 = vpop.f32.mrb[0].mxu0
    %v540 = vadd.f32 0.0, %v539
    %v541 = vpop.f32.mrb[0].mxu0
    %542 = vdwg.mxu0
    %v543 = vadd.f32 %v467, %v540
    %v544 = vxor.u32 %v543, 2147483648
    %v545 = vmul.f32 %v544, 1.442695
    %v546 = vpow.pop %v545
    %v547 = vadd.f32 %v546, 1.0
    %v548 = vrcp.pop %v547
    %v549 = vmul.f32 1.0, %v548
    %v550 = vadd.f32 %v540, %v306
    %552 = vrot.lane.b32.xlu0 %v550, 64
    %v553 = vpop.permute.xlu0 %552
    %v555 = vmul.f32 %v549, %v553
    %557 = vrot.lane.b32.xlu0 %v555, 64
    %v558 = vpop.permute.xlu0 %557
    %v560 = vadd.f32 %v467, %v558
    %v561 = vtanh.pop %v560
    %v562 = vsub.f32 1.0, %v549
    %564 = vrot.lane.b32.xlu0 %v561, 96
    %v565 = vpop.permute.xlu0 %564
    %v567 = vmul.f32 %v562, %v565
    %v568 = vmul.f32 %v549, %v448
    %v569 = vadd.f32 %v567, %v568
    %vm570 = vcmp.eq.s32.totalorder %v216, 2
    %v571 = vld [vmem:[#allocation3] sm:$0xff]
    %v572 = vsel %vm570, 1, 0
    %573 = vset.pattern.permute.xlu0 0
    %574 = vperm.xlu0 %573, %v572
    %v575 = vpop.permute.xlu0 %574
    %vm576 = vcmp.eq.s32.totalorder %v575, 1
    %578 = vrot.lane.b32.xlu0 %v571, 32
    %v579 = vpop.permute.xlu0 %578
    %v581 = vsel %vm576, %v569, %v579
    %583 = vrot.lane.b32.xlu0 %v581, 96
    %v584 = vpop.permute.xlu0 %583
    %586 = vst.msk [vmem:[#allocation3] sm:$0xff] %vm217, %v584
    %s587 = scalar_lea.vmem [#allocation2], 24
    %v588 = vld [vmem:[%s587] sm:$0xff]
    %590 = vrot.lane.b32.xlu0 %v569, 96
    %v591 = vpop.permute.xlu0 %590
    %v592 = vsel %vm217, %v591, 0
    %594 = vmatprep.subr.mxu0 0.0
    %595 = vmatpush1.msra.mxu0 %v211
    %596 = vmatprep.subr.mxu0 0.0
    %597 = vmatpush1.msra.mxu0 %v212
    %598 = vmatprep.subr.mxu0 0.0
    %599 = vmatpush1.msra.mxu0 %v213
    %600 = vmatprep.subr.mxu0 0.0
    %601 = vmatpush1.msra.mxu0 %v214
    %602 = vmatprep.subr.mxu0 0.0
    %603 = vmatpush1.msra.mxu0 0.0
    %604 = vmatprep.subr.mxu0 0.0
    %605 = vmatpush1.msra.mxu0 0.0
    %606 = vmatprep.subr.mxu0 0.0
    %607 = vmatpush1.msra.mxu0 0.0
    %608 = vmatprep.subr.mxu0 0.0
    %609 = vmatpush1.msra.mxu0 0.0
    %610 = vmatprep.subr.mxu0 0.0
    %611 = vmatpush1.msra.mxu0 0.0
    %612 = vmatprep.subr.mxu0 0.0
    %613 = vmatpush1.msra.mxu0 0.0
    %614 = vmatprep.subr.mxu0 0.0
    %615 = vmatpush1.msra.mxu0 0.0
    %616 = vmatprep.subr.mxu0 0.0
    %617 = vmatpush1.msra.mxu0 0.0
    %618 = vmatprep.subr.mxu0 0.0
    %619 = vmatpush1.msra.mxu0 0.0
    %620 = vmatprep.subr.mxu0 0.0
    %621 = vmatpush1.msra.mxu0 0.0
    %622 = vmatprep.subr.mxu0 0.0
    %623 = vmatpush1.msra.mxu0 0.0
    %624 = vmatprep.subr.mxu0 0.0
    %625 = vmatpush1.msra.mxu0 0.0
    %626 = vmatprep.subr.mxu0 0.0
    %627 = vmatpush1.msra.mxu0 0.0
    %628 = vmatprep.subr.mxu0 0.0
    %629 = vmatpush1.msra.mxu0 0.0
    %630 = vmatprep.subr.mxu0 0.0
    %631 = vmatpush1.msra.mxu0 0.0
    %632 = vmatprep.subr.mxu0 0.0
    %633 = vmatpush1.msra.mxu0 0.0
    %634 = vmatprep.subr.mxu0 0.0
    %635 = vmatpush1.msra.mxu0 0.0
    %636 = vmatprep.subr.mxu0 0.0
    %637 = vmatpush1.msra.mxu0 0.0
    %638 = vmatprep.subr.mxu0 0.0
    %639 = vmatpush1.msra.mxu0 0.0
    %640 = vmatprep.subr.mxu0 0.0
    %641 = vmatpush1.msra.mxu0 0.0
    %642 = vmatprep.subr.mxu0 0.0
    %643 = vmatpush1.msra.mxu0 0.0
    %644 = vmatprep.subr.mxu0 0.0
    %645 = vmatpush1.msra.mxu0 0.0
    %646 = vmatprep.subr.mxu0 0.0
    %647 = vmatpush1.msra.mxu0 0.0
    %648 = vmatprep.subr.mxu0 0.0
    %649 = vmatpush1.msra.mxu0 0.0
    %650 = vmatprep.subr.mxu0 0.0
    %651 = vmatpush1.msra.mxu0 0.0
    %652 = vmatprep.subr.mxu0 0.0
    %653 = vmatpush1.msra.mxu0 0.0
    %654 = vmatprep.subr.mxu0 0.0
    %655 = vmatpush1.msra.mxu0 0.0
    %656 = vmatprep.subr.mxu0 0.0
    %657 = vmatpush1.msra.mxu0 0.0
    %658 = vmatprep.mubr.f32.mxu0 0.0
    %659 = vmatmul.mubr.f32.gmra.mrb[0].mxu0 %v592
    %v660 = vpop.f32.mrb[0].mxu0
    %v661 = vadd.f32 0.0, %v660
    %v662 = vpop.f32.mrb[0].mxu0
    %663 = vdwg.mxu0
    %v664 = vadd.f32 %v588, %v661
    %v665 = vxor.u32 %v664, 2147483648
    %v666 = vmul.f32 %v665, 1.442695
    %v667 = vpow.pop %v666
    %v668 = vadd.f32 %v667, 1.0
    %v669 = vrcp.pop %v668
    %v670 = vmul.f32 1.0, %v669
    %v671 = vadd.f32 %v661, %v306
    %673 = vrot.lane.b32.xlu0 %v671, 64
    %v674 = vpop.permute.xlu0 %673
    %v676 = vmul.f32 %v670, %v674
    %678 = vrot.lane.b32.xlu0 %v676, 64
    %v679 = vpop.permute.xlu0 %678
    %v681 = vadd.f32 %v588, %v679
    %v682 = vtanh.pop %v681
    %v683 = vsub.f32 1.0, %v670
    %685 = vrot.lane.b32.xlu0 %v682, 96
    %v686 = vpop.permute.xlu0 %685
    %v688 = vmul.f32 %v683, %v686
    %v689 = vmul.f32 %v670, %v569
    %v690 = vadd.f32 %v688, %v689
    %vm691 = vcmp.eq.s32.totalorder %v216, 3
    %v692 = vld [vmem:[#allocation3] sm:$0xff]
    %v693 = vsel %vm691, 1, 0
    %694 = vset.pattern.permute.xlu0 0
    %695 = vperm.xlu0 %694, %v693
    %v696 = vpop.permute.xlu0 %695
    %vm697 = vcmp.eq.s32.totalorder %v696, 1
    %699 = vrot.lane.b32.xlu0 %v692, 32
    %v700 = vpop.permute.xlu0 %699
    %v702 = vsel %vm697, %v690, %v700
    %704 = vrot.lane.b32.xlu0 %v702, 96
    %v705 = vpop.permute.xlu0 %704
    %707 = vst.msk [vmem:[#allocation3] sm:$0xff] %vm217, %v705
    %s708 = scalar_lea.vmem [#allocation2], 32
    %v709 = vld [vmem:[%s708] sm:$0xff]
    %711 = vrot.lane.b32.xlu0 %v690, 96
    %v712 = vpop.permute.xlu0 %711
    %v713 = vsel %vm217, %v712, 0
    %715 = vmatprep.subr.mxu0 0.0
    %716 = vmatpush1.msra.mxu0 %v211
    %717 = vmatprep.subr.mxu0 0.0
    %718 = vmatpush1.msra.mxu0 %v212
    %719 = vmatprep.subr.mxu0 0.0
    %720 = vmatpush1.msra.mxu0 %v213
    %721 = vmatprep.subr.mxu0 0.0
    %722 = vmatpush1.msra.mxu0 %v214
    %723 = vmatprep.subr.mxu0 0.0
    %724 = vmatpush1.msra.mxu0 0.0
    %725 = vmatprep.subr.mxu0 0.0
    %726 = vmatpush1.msra.mxu0 0.0
    %727 = vmatprep.subr.mxu0 0.0
    %728 = vmatpush1.msra.mxu0 0.0
    %729 = vmatprep.subr.mxu0 0.0
    %730 = vmatpush1.msra.mxu0 0.0
    %731 = vmatprep.subr.mxu0 0.0
    %732 = vmatpush1.msra.mxu0 0.0
    %733 = vmatprep.subr.mxu0 0.0
    %734 = vmatpush1.msra.mxu0 0.0
    %735 = vmatprep.subr.mxu0 0.0
    %736 = vmatpush1.msra.mxu0 0.0
    %737 = vmatprep.subr.mxu0 0.0
    %738 = vmatpush1.msra.mxu0 0.0
    %739 = vmatprep.subr.mxu0 0.0
    %740 = vmatpush1.msra.mxu0 0.0
    %741 = vmatprep.subr.mxu0 0.0
    %742 = vmatpush1.msra.mxu0 0.0
    %743 = vmatprep.subr.mxu0 0.0
    %744 = vmatpush1.msra.mxu0 0.0
    %745 = vmatprep.subr.mxu0 0.0
    %746 = vmatpush1.msra.mxu0 0.0
    %747 = vmatprep.subr.mxu0 0.0
    %748 = vmatpush1.msra.mxu0 0.0
    %749 = vmatprep.subr.mxu0 0.0
    %750 = vmatpush1.msra.mxu0 0.0
    %751 = vmatprep.subr.mxu0 0.0
    %752 = vmatpush1.msra.mxu0 0.0
    %753 = vmatprep.subr.mxu0 0.0
    %754 = vmatpush1.msra.mxu0 0.0
    %755 = vmatprep.subr.mxu0 0.0
    %756 = vmatpush1.msra.mxu0 0.0
    %757 = vmatprep.subr.mxu0 0.0
    %758 = vmatpush1.msra.mxu0 0.0
    %759 = vmatprep.subr.mxu0 0.0
    %760 = vmatpush1.msra.mxu0 0.0
    %761 = vmatprep.subr.mxu0 0.0
    %762 = vmatpush1.msra.mxu0 0.0
    %763 = vmatprep.subr.mxu0 0.0
    %764 = vmatpush1.msra.mxu0 0.0
    %765 = vmatprep.subr.mxu0 0.0
    %766 = vmatpush1.msra.mxu0 0.0
    %767 = vmatprep.subr.mxu0 0.0
    %768 = vmatpush1.msra.mxu0 0.0
    %769 = vmatprep.subr.mxu0 0.0
    %770 = vmatpush1.msra.mxu0 0.0
    %771 = vmatprep.subr.mxu0 0.0
    %772 = vmatpush1.msra.mxu0 0.0
    %773 = vmatprep.subr.mxu0 0.0
    %774 = vmatpush1.msra.mxu0 0.0
    %775 = vmatprep.subr.mxu0 0.0
    %776 = vmatpush1.msra.mxu0 0.0
    %777 = vmatprep.subr.mxu0 0.0
    %778 = vmatpush1.msra.mxu0 0.0
    %779 = vmatprep.mubr.f32.mxu0 0.0
    %780 = vmatmul.mubr.f32.gmra.mrb[0].mxu0 %v713
    %v781 = vpop.f32.mrb[0].mxu0
    %v782 = vadd.f32 0.0, %v781
    %v783 = vpop.f32.mrb[0].mxu0
    %784 = vdwg.mxu0
    %v785 = vadd.f32 %v709, %v782
    %v786 = vxor.u32 %v785, 2147483648
    %v787 = vmul.f32 %v786, 1.442695
    %v788 = vpow.pop %v787
    %v789 = vadd.f32 %v788, 1.0
    %v790 = vrcp.pop %v789
    %v791 = vmul.f32 1.0, %v790
    %v792 = vadd.f32 %v782, %v306
    %794 = vrot.lane.b32.xlu0 %v792, 64
    %v795 = vpop.permute.xlu0 %794
    %v797 = vmul.f32 %v791, %v795
    %799 = vrot.lane.b32.xlu0 %v797, 64
    %v800 = vpop.permute.xlu0 %799
    %v802 = vadd.f32 %v709, %v800
    %v803 = vtanh.pop %v802
    %v804 = vsub.f32 1.0, %v791
    %806 = vrot.lane.b32.xlu0 %v803, 96
    %v807 = vpop.permute.xlu0 %806
    %v809 = vmul.f32 %v804, %v807
    %v810 = vmul.f32 %v791, %v690
    %v811 = vadd.f32 %v809, %v810
    %vm812 = vcmp.eq.s32.totalorder %v216, 4
    %v813 = vld [vmem:[#allocation3] sm:$0xff]
    %v814 = vsel %vm812, 1, 0
    %815 = vset.pattern.permute.xlu0 0
    %816 = vperm.xlu0 %815, %v814
    %v817 = vpop.permute.xlu0 %816
    %vm818 = vcmp.eq.s32.totalorder %v817, 1
    %820 = vrot.lane.b32.xlu0 %v813, 32
    %v821 = vpop.permute.xlu0 %820
    %v823 = vsel %vm818, %v811, %v821
    %825 = vrot.lane.b32.xlu0 %v823, 96
    %v826 = vpop.permute.xlu0 %825
    %828 = vst.msk [vmem:[#allocation3] sm:$0xff] %vm217, %v826
    %s829 = scalar_lea.vmem [#allocation2], 40
    %v830 = vld [vmem:[%s829] sm:$0xff]
    %832 = vrot.lane.b32.xlu0 %v811, 96
    %v833 = vpop.permute.xlu0 %832
    %v834 = vsel %vm217, %v833, 0
    %836 = vmatprep.subr.mxu0 0.0
    %837 = vmatpush1.msra.mxu0 %v211
    %838 = vmatprep.subr.mxu0 0.0
    %839 = vmatpush1.msra.mxu0 %v212
    %840 = vmatprep.subr.mxu0 0.0
    %841 = vmatpush1.msra.mxu0 %v213
    %842 = vmatprep.subr.mxu0 0.0
    %843 = vmatpush1.msra.mxu0 %v214
    %844 = vmatprep.subr.mxu0 0.0
    %845 = vmatpush1.msra.mxu0 0.0
    %846 = vmatprep.subr.mxu0 0.0
    %847 = vmatpush1.msra.mxu0 0.0
    %848 = vmatprep.subr.mxu0 0.0
    %849 = vmatpush1.msra.mxu0 0.0
    %850 = vmatprep.subr.mxu0 0.0
    %851 = vmatpush1.msra.mxu0 0.0
    %852 = vmatprep.subr.mxu0 0.0
    %853 = vmatpush1.msra.mxu0 0.0
    %854 = vmatprep.subr.mxu0 0.0
    %855 = vmatpush1.msra.mxu0 0.0
    %856 = vmatprep.subr.mxu0 0.0
    %857 = vmatpush1.msra.mxu0 0.0
    %858 = vmatprep.subr.mxu0 0.0
    %859 = vmatpush1.msra.mxu0 0.0
    %860 = vmatprep.subr.mxu0 0.0
    %861 = vmatpush1.msra.mxu0 0.0
    %862 = vmatprep.subr.mxu0 0.0
    %863 = vmatpush1.msra.mxu0 0.0
    %864 = vmatprep.subr.mxu0 0.0
    %865 = vmatpush1.msra.mxu0 0.0
    %866 = vmatprep.subr.mxu0 0.0
    %867 = vmatpush1.msra.mxu0 0.0
    %868 = vmatprep.subr.mxu0 0.0
    %869 = vmatpush1.msra.mxu0 0.0
    %870 = vmatprep.subr.mxu0 0.0
    %871 = vmatpush1.msra.mxu0 0.0
    %872 = vmatprep.subr.mxu0 0.0
    %873 = vmatpush1.msra.mxu0 0.0
    %874 = vmatprep.subr.mxu0 0.0
    %875 = vmatpush1.msra.mxu0 0.0
    %876 = vmatprep.subr.mxu0 0.0
    %877 = vmatpush1.msra.mxu0 0.0
    %878 = vmatprep.subr.mxu0 0.0
    %879 = vmatpush1.msra.mxu0 0.0
    %880 = vmatprep.subr.mxu0 0.0
    %881 = vmatpush1.msra.mxu0 0.0
    %882 = vmatprep.subr.mxu0 0.0
    %883 = vmatpush1.msra.mxu0 0.0
    %884 = vmatprep.subr.mxu0 0.0
    %885 = vmatpush1.msra.mxu0 0.0
    %886 = vmatprep.subr.mxu0 0.0
    %887 = vmatpush1.msra.mxu0 0.0
    %888 = vmatprep.subr.mxu0 0.0
    %889 = vmatpush1.msra.mxu0 0.0
    %890 = vmatprep.subr.mxu0 0.0
    %891 = vmatpush1.msra.mxu0 0.0
    %892 = vmatprep.subr.mxu0 0.0
    %893 = vmatpush1.msra.mxu0 0.0
    %894 = vmatprep.subr.mxu0 0.0
    %895 = vmatpush1.msra.mxu0 0.0
    %896 = vmatprep.subr.mxu0 0.0
    %897 = vmatpush1.msra.mxu0 0.0
    %898 = vmatprep.subr.mxu0 0.0
    %899 = vmatpush1.msra.mxu0 0.0
    %900 = vmatprep.mubr.f32.mxu0 0.0
    %901 = vmatmul.mubr.f32.gmra.mrb[0].mxu0 %v834
    %v902 = vpop.f32.mrb[0].mxu0
    %v903 = vadd.f32 0.0, %v902
    %v904 = vpop.f32.mrb[0].mxu0
    %905 = vdwg.mxu0
    %v906 = vadd.f32 %v830, %v903
    %v907 = vxor.u32 %v906, 2147483648
    %v908 = vmul.f32 %v907, 1.442695
    %v909 = vpow.pop %v908
    %v910 = vadd.f32 %v909, 1.0
    %v911 = vrcp.pop %v910
    %v912 = vmul.f32 1.0, %v911
    %v913 = vadd.f32 %v903, %v306
    %915 = vrot.lane.b32.xlu0 %v913, 64
    %v916 = vpop.permute.xlu0 %915
    %v918 = vmul.f32 %v912, %v916
    %920 = vrot.lane.b32.xlu0 %v918, 64
    %v921 = vpop.permute.xlu0 %920
    %v923 = vadd.f32 %v830, %v921
    %v924 = vtanh.pop %v923
    %v925 = vsub.f32 1.0, %v912
    %927 = vrot.lane.b32.xlu0 %v924, 96
    %v928 = vpop.permute.xlu0 %927
    %v930 = vmul.f32 %v925, %v928
    %v931 = vmul.f32 %v912, %v811
    %v932 = vadd.f32 %v930, %v931
    %vm933 = vcmp.eq.s32.totalorder %v216, 5
    %v934 = vld [vmem:[#allocation3] sm:$0xff]
    %v935 = vsel %vm933, 1, 0
    %936 = vset.pattern.permute.xlu0 0
    %937 = vperm.xlu0 %936, %v935
    %v938 = vpop.permute.xlu0 %937
    %vm939 = vcmp.eq.s32.totalorder %v938, 1
    %941 = vrot.lane.b32.xlu0 %v934, 32
    %v942 = vpop.permute.xlu0 %941
    %v944 = vsel %vm939, %v932, %v942
    %946 = vrot.lane.b32.xlu0 %v944, 96
    %v947 = vpop.permute.xlu0 %946
    %949 = vst.msk [vmem:[#allocation3] sm:$0xff] %vm217, %v947
    %s950 = scalar_lea.vmem [#allocation2], 48
    %v951 = vld [vmem:[%s950] sm:$0xff]
    %953 = vrot.lane.b32.xlu0 %v932, 96
    %v954 = vpop.permute.xlu0 %953
    %v955 = vsel %vm217, %v954, 0
    %957 = vmatprep.subr.mxu0 0.0
    %958 = vmatpush1.msra.mxu0 %v211
    %959 = vmatprep.subr.mxu0 0.0
    %960 = vmatpush1.msra.mxu0 %v212
    %961 = vmatprep.subr.mxu0 0.0
    %962 = vmatpush1.msra.mxu0 %v213
    %963 = vmatprep.subr.mxu0 0.0
    %964 = vmatpush1.msra.mxu0 %v214
    %965 = vmatprep.subr.mxu0 0.0
    %966 = vmatpush1.msra.mxu0 0.0
    %967 = vmatprep.subr.mxu0 0.0
    %968 = vmatpush1.msra.mxu0 0.0
    %969 = vmatprep.subr.mxu0 0.0
    %970 = vmatpush1.msra.mxu0 0.0
    %971 = vmatprep.subr.mxu0 0.0
    %972 = vmatpush1.msra.mxu0 0.0
    %973 = vmatprep.subr.mxu0 0.0
    %974 = vmatpush1.msra.mxu0 0.0
    %975 = vmatprep.subr.mxu0 0.0
    %976 = vmatpush1.msra.mxu0 0.0
    %977 = vmatprep.subr.mxu0 0.0
    %978 = vmatpush1.msra.mxu0 0.0
    %979 = vmatprep.subr.mxu0 0.0
    %980 = vmatpush1.msra.mxu0 0.0
    %981 = vmatprep.subr.mxu0 0.0
    %982 = vmatpush1.msra.mxu0 0.0
    %983 = vmatprep.subr.mxu0 0.0
    %984 = vmatpush1.msra.mxu0 0.0
    %985 = vmatprep.subr.mxu0 0.0
    %986 = vmatpush1.msra.mxu0 0.0
    %987 = vmatprep.subr.mxu0 0.0
    %988 = vmatpush1.msra.mxu0 0.0
    %989 = vmatprep.subr.mxu0 0.0
    %990 = vmatpush1.msra.mxu0 0.0
    %991 = vmatprep.subr.mxu0 0.0
    %992 = vmatpush1.msra.mxu0 0.0
    %993 = vmatprep.subr.mxu0 0.0
    %994 = vmatpush1.msra.mxu0 0.0
    %995 = vmatprep.subr.mxu0 0.0
    %996 = vmatpush1.msra.mxu0 0.0
    %997 = vmatprep.subr.mxu0 0.0
    %998 = vmatpush1.msra.mxu0 0.0
    %999 = vmatprep.subr.mxu0 0.0
    %1000 = vmatpush1.msra.mxu0 0.0
    %1001 = vmatprep.subr.mxu0 0.0
    %1002 = vmatpush1.msra.mxu0 0.0
    %1003 = vmatprep.subr.mxu0 0.0
    %1004 = vmatpush1.msra.mxu0 0.0
    %1005 = vmatprep.subr.mxu0 0.0
    %1006 = vmatpush1.msra.mxu0 0.0
    %1007 = vmatprep.subr.mxu0 0.0
    %1008 = vmatpush1.msra.mxu0 0.0
    %1009 = vmatprep.subr.mxu0 0.0
    %1010 = vmatpush1.msra.mxu0 0.0
    %1011 = vmatprep.subr.mxu0 0.0
    %1012 = vmatpush1.msra.mxu0 0.0
    %1013 = vmatprep.subr.mxu0 0.0
    %1014 = vmatpush1.msra.mxu0 0.0
    %1015 = vmatprep.subr.mxu0 0.0
    %1016 = vmatpush1.msra.mxu0 0.0
    %1017 = vmatprep.subr.mxu0 0.0
    %1018 = vmatpush1.msra.mxu0 0.0
    %1019 = vmatprep.subr.mxu0 0.0
    %1020 = vmatpush1.msra.mxu0 0.0
    %1021 = vmatprep.mubr.f32.mxu0 0.0
    %1022 = vmatmul.mubr.f32.gmra.mrb[0].mxu0 %v955
    %v1023 = vpop.f32.mrb[0].mxu0
    %v1024 = vadd.f32 0.0, %v1023
    %v1025 = vpop.f32.mrb[0].mxu0
    %1026 = vdwg.mxu0
    %v1027 = vadd.f32 %v951, %v1024
    %v1028 = vxor.u32 %v1027, 2147483648
    %v1029 = vmul.f32 %v1028, 1.442695
    %v1030 = vpow.pop %v1029
    %v1031 = vadd.f32 %v1030, 1.0
    %v1032 = vrcp.pop %v1031
    %v1033 = vmul.f32 1.0, %v1032
    %v1034 = vadd.f32 %v1024, %v306
    %1036 = vrot.lane.b32.xlu0 %v1034, 64
    %v1037 = vpop.permute.xlu0 %1036
    %v1039 = vmul.f32 %v1033, %v1037
    %1041 = vrot.lane.b32.xlu0 %v1039, 64
    %v1042 = vpop.permute.xlu0 %1041
    %v1044 = vadd.f32 %v951, %v1042
    %v1045 = vtanh.pop %v1044
    %v1046 = vsub.f32 1.0, %v1033
    %1048 = vrot.lane.b32.xlu0 %v1045, 96
    %v1049 = vpop.permute.xlu0 %1048
    %v1051 = vmul.f32 %v1046, %v1049
    %v1052 = vmul.f32 %v1033, %v932
    %v1053 = vadd.f32 %v1051, %v1052
    %vm1054 = vcmp.eq.s32.totalorder %v216, 6
    %v1055 = vld [vmem:[#allocation3] sm:$0xff]
    %v1056 = vsel %vm1054, 1, 0
    %1057 = vset.pattern.permute.xlu0 0
    %1058 = vperm.xlu0 %1057, %v1056
    %v1059 = vpop.permute.xlu0 %1058
    %vm1060 = vcmp.eq.s32.totalorder %v1059, 1
    %1062 = vrot.lane.b32.xlu0 %v1055, 32
    %v1063 = vpop.permute.xlu0 %1062
    %v1065 = vsel %vm1060, %v1053, %v1063
    %1067 = vrot.lane.b32.xlu0 %v1065, 96
    %v1068 = vpop.permute.xlu0 %1067
    %1070 = vst.msk [vmem:[#allocation3] sm:$0xff] %vm217, %v1068
    %s1071 = scalar_lea.vmem [#allocation2], 56
    %v1072 = vld [vmem:[%s1071] sm:$0xff]
    %1074 = vrot.lane.b32.xlu0 %v1053, 96
    %v1075 = vpop.permute.xlu0 %1074
    %v1076 = vsel %vm217, %v1075, 0
    %1078 = vmatprep.subr.mxu0 0.0
    %1079 = vmatpush1.msra.mxu0 %v211
    %1080 = vmatprep.subr.mxu0 0.0
    %1081 = vmatpush1.msra.mxu0 %v212
    %1082 = vmatprep.subr.mxu0 0.0
    %1083 = vmatpush1.msra.mxu0 %v213
    %1084 = vmatprep.subr.mxu0 0.0
    %1085 = vmatpush1.msra.mxu0 %v214
    %1086 = vmatprep.subr.mxu0 0.0
    %1087 = vmatpush1.msra.mxu0 0.0
    %1088 = vmatprep.subr.mxu0 0.0
    %1089 = vmatpush1.msra.mxu0 0.0
    %1090 = vmatprep.subr.mxu0 0.0
    %1091 = vmatpush1.msra.mxu0 0.0
    %1092 = vmatprep.subr.mxu0 0.0
    %1093 = vmatpush1.msra.mxu0 0.0
    %1094 = vmatprep.subr.mxu0 0.0
    %1095 = vmatpush1.msra.mxu0 0.0
    %1096 = vmatprep.subr.mxu0 0.0
    %1097 = vmatpush1.msra.mxu0 0.0
    %1098 = vmatprep.subr.mxu0 0.0
    %1099 = vmatpush1.msra.mxu0 0.0
    %1100 = vmatprep.subr.mxu0 0.0
    %1101 = vmatpush1.msra.mxu0 0.0
    %1102 = vmatprep.subr.mxu0 0.0
    %1103 = vmatpush1.msra.mxu0 0.0
    %1104 = vmatprep.subr.mxu0 0.0
    %1105 = vmatpush1.msra.mxu0 0.0
    %1106 = vmatprep.subr.mxu0 0.0
    %1107 = vmatpush1.msra.mxu0 0.0
    %1108 = vmatprep.subr.mxu0 0.0
    %1109 = vmatpush1.msra.mxu0 0.0
    %1110 = vmatprep.subr.mxu0 0.0
    %1111 = vmatpush1.msra.mxu0 0.0
    %1112 = vmatprep.subr.mxu0 0.0
    %1113 = vmatpush1.msra.mxu0 0.0
    %1114 = vmatprep.subr.mxu0 0.0
    %1115 = vmatpush1.msra.mxu0 0.0
    %1116 = vmatprep.subr.mxu0 0.0
    %1117 = vmatpush1.msra.mxu0 0.0
    %1118 = vmatprep.subr.mxu0 0.0
    %1119 = vmatpush1.msra.mxu0 0.0
    %1120 = vmatprep.subr.mxu0 0.0
    %1121 = vmatpush1.msra.mxu0 0.0
    %1122 = vmatprep.subr.mxu0 0.0
    %1123 = vmatpush1.msra.mxu0 0.0
    %1124 = vmatprep.subr.mxu0 0.0
    %1125 = vmatpush1.msra.mxu0 0.0
    %1126 = vmatprep.subr.mxu0 0.0
    %1127 = vmatpush1.msra.mxu0 0.0
    %1128 = vmatprep.subr.mxu0 0.0
    %1129 = vmatpush1.msra.mxu0 0.0
    %1130 = vmatprep.subr.mxu0 0.0
    %1131 = vmatpush1.msra.mxu0 0.0
    %1132 = vmatprep.subr.mxu0 0.0
    %1133 = vmatpush1.msra.mxu0 0.0
    %1134 = vmatprep.subr.mxu0 0.0
    %1135 = vmatpush1.msra.mxu0 0.0
    %1136 = vmatprep.subr.mxu0 0.0
    %1137 = vmatpush1.msra.mxu0 0.0
    %1138 = vmatprep.subr.mxu0 0.0
    %1139 = vmatpush1.msra.mxu0 0.0
    %1140 = vmatprep.subr.mxu0 0.0
    %1141 = vmatpush1.msra.mxu0 0.0
    %1142 = vmatprep.mubr.f32.mxu0 0.0
    %1143 = vmatmul.mubr.f32.gmra.mrb[0].mxu0 %v1076
    %v1144 = vpop.f32.mrb[0].mxu0
    %v1145 = vadd.f32 0.0, %v1144
    %v1146 = vpop.f32.mrb[0].mxu0
    %1147 = vdwg.mxu0
    %v1148 = vadd.f32 %v1072, %v1145
    %v1149 = vxor.u32 %v1148, 2147483648
    %v1150 = vmul.f32 %v1149, 1.442695
    %v1151 = vpow.pop %v1150
    %v1152 = vadd.f32 %v1151, 1.0
    %v1153 = vrcp.pop %v1152
    %v1154 = vmul.f32 1.0, %v1153
    %v1155 = vadd.f32 %v1145, %v306
    %1157 = vrot.lane.b32.xlu0 %v1155, 64
    %v1158 = vpop.permute.xlu0 %1157
    %v1160 = vmul.f32 %v1154, %v1158
    %1162 = vrot.lane.b32.xlu0 %v1160, 64
    %v1163 = vpop.permute.xlu0 %1162
    %v1165 = vadd.f32 %v1072, %v1163
    %v1166 = vtanh.pop %v1165
    %v1167 = vsub.f32 1.0, %v1154
    %1169 = vrot.lane.b32.xlu0 %v1166, 96
    %v1170 = vpop.permute.xlu0 %1169
    %v1172 = vmul.f32 %v1167, %v1170
    %v1173 = vmul.f32 %v1154, %v1053
    %v1174 = vadd.f32 %v1172, %v1173
    %vm1175 = vcmp.eq.s32.totalorder %v216, 7
    %v1176 = vld [vmem:[#allocation3] sm:$0xff]
    %v1177 = vsel %vm1175, 1, 0
    %1178 = vset.pattern.permute.xlu0 0
    %1179 = vperm.xlu0 %1178, %v1177
    %v1180 = vpop.permute.xlu0 %1179
    %vm1181 = vcmp.eq.s32.totalorder %v1180, 1
    %1183 = vrot.lane.b32.xlu0 %v1176, 32
    %v1184 = vpop.permute.xlu0 %1183
    %v1186 = vsel %vm1181, %v1174, %v1184
    %1188 = vrot.lane.b32.xlu0 %v1186, 96
    %v1189 = vpop.permute.xlu0 %1188
    %1191 = vst.msk [vmem:[#allocation3] sm:$0xff] %vm217, %v1189
    %v1192 = vld [vmem:[#allocation3] sm:$0xff]
    %v1193 = vld [vmem:[%s6] sm:$0xff]
    %v1194 = vld [vmem:[%s6 + $0x8] sm:$0xff]
    %v1195 = vld [vmem:[%s6 + $0x10] sm:$0xff]
    %v1196 = vld [vmem:[%s6 + $0x18] sm:$0xff]
    %v1197 = vld [vmem:[%s6 + $0x20] sm:$0xff]
    %v1198 = vld [vmem:[%s6 + $0x28] sm:$0xff]
    %v1199 = vld [vmem:[%s6 + $0x30] sm:$0xff]
    %v1200 = vld [vmem:[%s6 + $0x38] sm:$0xff]
    %v1201 = vld [vmem:[%s7] sm:$0x3]
    %v1203 = vlaneseq
    %v1204 = vshrl.u32 %v1203, 7
    %v1205 = vsub.s32 0, %v1204
    %v1206 = vrot.slane %v1201, %v1205
    %v1207 = vlaneseq
    %v1208 = vshrl.u32 %v1207, 7
    %v1209 = vsub.s32 1, %v1208
    %v1210 = vrot.slane %v1201, %v1209
    %v1214 = vsel %vm217, %v1192, 0
    %1216 = vmatprep.subr.mxu0 %v1194
    %1217 = vmatpush1.msra.mxu0 %v1193
    %1218 = vmatprep.subr.mxu0 %v1196
    %1219 = vmatpush1.msra.mxu0 %v1195
    %1220 = vmatprep.subr.mxu0 %v1198
    %1221 = vmatpush1.msra.mxu0 %v1197
    %1222 = vmatprep.subr.mxu0 %v1200
    %1223 = vmatpush1.msra.mxu0 %v1199
    %1224 = vmatprep.subr.mxu0 0.0
    %1225 = vmatpush1.msra.mxu0 0.0
    %1226 = vmatprep.subr.mxu0 0.0
    %1227 = vmatpush1.msra.mxu0 0.0
    %1228 = vmatprep.subr.mxu0 0.0
    %1229 = vmatpush1.msra.mxu0 0.0
    %1230 = vmatprep.subr.mxu0 0.0
    %1231 = vmatpush1.msra.mxu0 0.0
    %1232 = vmatprep.subr.mxu0 0.0
    %1233 = vmatpush1.msra.mxu0 0.0
    %1234 = vmatprep.subr.mxu0 0.0
    %1235 = vmatpush1.msra.mxu0 0.0
    %1236 = vmatprep.subr.mxu0 0.0
    %1237 = vmatpush1.msra.mxu0 0.0
    %1238 = vmatprep.subr.mxu0 0.0
    %1239 = vmatpush1.msra.mxu0 0.0
    %1240 = vmatprep.subr.mxu0 0.0
    %1241 = vmatpush1.msra.mxu0 0.0
    %1242 = vmatprep.subr.mxu0 0.0
    %1243 = vmatpush1.msra.mxu0 0.0
    %1244 = vmatprep.subr.mxu0 0.0
    %1245 = vmatpush1.msra.mxu0 0.0
    %1246 = vmatprep.subr.mxu0 0.0
    %1247 = vmatpush1.msra.mxu0 0.0
    %1248 = vmatprep.subr.mxu0 0.0
    %1249 = vmatpush1.msra.mxu0 0.0
    %1250 = vmatprep.subr.mxu0 0.0
    %1251 = vmatpush1.msra.mxu0 0.0
    %1252 = vmatprep.subr.mxu0 0.0
    %1253 = vmatpush1.msra.mxu0 0.0
    %1254 = vmatprep.subr.mxu0 0.0
    %1255 = vmatpush1.msra.mxu0 0.0
    %1256 = vmatprep.subr.mxu0 0.0
    %1257 = vmatpush1.msra.mxu0 0.0
    %1258 = vmatprep.subr.mxu0 0.0
    %1259 = vmatpush1.msra.mxu0 0.0
    %1260 = vmatprep.subr.mxu0 0.0
    %1261 = vmatpush1.msra.mxu0 0.0
    %1262 = vmatprep.subr.mxu0 0.0
    %1263 = vmatpush1.msra.mxu0 0.0
    %1264 = vmatprep.subr.mxu0 0.0
    %1265 = vmatpush1.msra.mxu0 0.0
    %1266 = vmatprep.subr.mxu0 0.0
    %1267 = vmatpush1.msra.mxu0 0.0
    %1268 = vmatprep.subr.mxu0 0.0
    %1269 = vmatpush1.msra.mxu0 0.0
    %1270 = vmatprep.subr.mxu0 0.0
    %1271 = vmatpush1.msra.mxu0 0.0
    %1272 = vmatprep.subr.mxu0 0.0
    %1273 = vmatpush1.msra.mxu0 0.0
    %1274 = vmatprep.subr.mxu0 0.0
    %1275 = vmatpush1.msra.mxu0 0.0
    %1276 = vmatprep.subr.mxu0 0.0
    %1277 = vmatpush1.msra.mxu0 0.0
    %1278 = vmatprep.subr.mxu0 0.0
    %1279 = vmatpush1.msra.mxu0 0.0
    %1280 = vmatprep.mubr.f32.mxu0 0.0
    %1281 = vmatmul.mubr.f32.gmra.mrb[0].mxu0 %v1214
    %v1282 = vpop.f32.mrb[0].mxu0
    %v1283 = vadd.f32 %v1206, %v1282
    %v1284 = vpop.f32.mrb[0].mxu0
    %v1285 = vadd.f32 %v1210, %v1284
    %1286 = vdwg.mxu0
    %v1287 = vmax.f32 %v1283, 0.0
    %v1288 = vmax.f32 %v1285, 0.0
    %v1289 = vld [vmem:[#allocation4] sm:$0xff]
    %v1290 = vld [vmem:[#allocation4 + $0x8] sm:$0xff]
    %v1291 = vld [vmem:[#allocation4 + $0x10] sm:$0xff]
    %v1292 = vld [vmem:[#allocation4 + $0x18] sm:$0xff]
    %v1293 = vld [vmem:[#allocation4 + $0x20] sm:$0xff]
    %v1294 = vld [vmem:[#allocation4 + $0x28] sm:$0xff]
    %v1295 = vld [vmem:[#allocation4 + $0x30] sm:$0xff]
    %v1296 = vld [vmem:[#allocation4 + $0x38] sm:$0xff]
    %v1297 = vld [vmem:[#allocation4 + $0x40] sm:$0xff]
    %v1298 = vld [vmem:[#allocation4 + $0x48] sm:$0xff]
    %v1299 = vld [vmem:[#allocation4 + $0x50] sm:$0xff]
    %v1300 = vld [vmem:[#allocation4 + $0x58] sm:$0xff]
    %v1301 = vld [vmem:[#allocation4 + $0x60] sm:$0xff]
    %v1302 = vld [vmem:[#allocation4 + $0x68] sm:$0xff]
    %v1303 = vld [vmem:[#allocation4 + $0x70] sm:$0xff]
    %v1304 = vld [vmem:[#allocation4 + $0x78] sm:$0xff]
    %v1305 = vld [vmem:[#allocation4 + $0x80] sm:$0xff]
    %v1306 = vld [vmem:[#allocation4 + $0x88] sm:$0xff]
    %v1307 = vld [vmem:[#allocation4 + $0x90] sm:$0xff]
    %v1308 = vld [vmem:[#allocation4 + $0x98] sm:$0xff]
    %v1309 = vld [vmem:[#allocation4 + $0xa0] sm:$0xff]
    %v1310 = vld [vmem:[#allocation4 + $0xa8] sm:$0xff]
    %v1311 = vld [vmem:[#allocation4 + $0xb0] sm:$0xff]
    %v1312 = vld [vmem:[#allocation4 + $0xb8] sm:$0xff]
    %v1313 = vld [vmem:[#allocation4 + $0xc0] sm:$0xff]
    %v1314 = vld [vmem:[#allocation4 + $0xc8] sm:$0xff]
    %v1315 = vld [vmem:[#allocation4 + $0xd0] sm:$0xff]
    %v1316 = vld [vmem:[#allocation4 + $0xd8] sm:$0xff]
    %v1317 = vld [vmem:[#allocation4 + $0xe0] sm:$0xff]
    %v1318 = vld [vmem:[#allocation4 + $0xe8] sm:$0xff]
    %v1319 = vld [vmem:[#allocation4 + $0xf0] sm:$0xff]
    %v1320 = vld [vmem:[#allocation4 + $0xf8] sm:$0xff]
    %v1321 = vld [vmem:[%s9] sm:$0x1]
    %v1323 = vlaneseq
    %v1324 = vshrl.u32 %v1323, 7
    %v1325 = vsub.s32 0, %v1324
    %v1326 = vrot.slane %v1321, %v1325
    %1328 = vmatprep.subr.mxu0 0.0
    %1329 = vmatpush1.msra.mxu0 %v1289
    %1330 = vmatprep.subr.mxu0 0.0
    %1331 = vmatpush1.msra.mxu0 %v1290
    %1332 = vmatprep.subr.mxu0 0.0
    %1333 = vmatpush1.msra.mxu0 %v1291
    %1334 = vmatprep.subr.mxu0 0.0
    %1335 = vmatpush1.msra.mxu0 %v1292
    %1336 = vmatprep.subr.mxu0 0.0
    %1337 = vmatpush1.msra.mxu0 %v1293
    %1338 = vmatprep.subr.mxu0 0.0
    %1339 = vmatpush1.msra.mxu0 %v1294
    %1340 = vmatprep.subr.mxu0 0.0
    %1341 = vmatpush1.msra.mxu0 %v1295
    %1342 = vmatprep.subr.mxu0 0.0
    %1343 = vmatpush1.msra.mxu0 %v1296
    %1344 = vmatprep.subr.mxu0 0.0
    %1345 = vmatpush1.msra.mxu0 %v1297
    %1346 = vmatprep.subr.mxu0 0.0
    %1347 = vmatpush1.msra.mxu0 %v1298
    %1348 = vmatprep.subr.mxu0 0.0
    %1349 = vmatpush1.msra.mxu0 %v1299
    %1350 = vmatprep.subr.mxu0 0.0
    %1351 = vmatpush1.msra.mxu0 %v1300
    %1352 = vmatprep.subr.mxu0 0.0
    %1353 = vmatpush1.msra.mxu0 %v1301
    %1354 = vmatprep.subr.mxu0 0.0
    %1355 = vmatpush1.msra.mxu0 %v1302
    %1356 = vmatprep.subr.mxu0 0.0
    %1357 = vmatpush1.msra.mxu0 %v1303
    %1358 = vmatprep.subr.mxu0 0.0
    %1359 = vmatpush1.msra.mxu0 %v1304
    %1360 = vmatprep.subr.mxu0 0.0
    %1361 = vmatpush1.msra.mxu0 %v1305
    %1362 = vmatprep.subr.mxu0 0.0
    %1363 = vmatpush1.msra.mxu0 %v1306
    %1364 = vmatprep.subr.mxu0 0.0
    %1365 = vmatpush1.msra.mxu0 %v1307
    %1366 = vmatprep.subr.mxu0 0.0
    %1367 = vmatpush1.msra.mxu0 %v1308
    %1368 = vmatprep.subr.mxu0 0.0
    %1369 = vmatpush1.msra.mxu0 %v1309
    %1370 = vmatprep.subr.mxu0 0.0
    %1371 = vmatpush1.msra.mxu0 %v1310
    %1372 = vmatprep.subr.mxu0 0.0
    %1373 = vmatpush1.msra.mxu0 %v1311
    %1374 = vmatprep.subr.mxu0 0.0
    %1375 = vmatpush1.msra.mxu0 %v1312
    %1376 = vmatprep.subr.mxu0 0.0
    %1377 = vmatpush1.msra.mxu0 %v1313
    %1378 = vmatprep.subr.mxu0 0.0
    %1379 = vmatpush1.msra.mxu0 %v1314
    %1380 = vmatprep.subr.mxu0 0.0
    %1381 = vmatpush1.msra.mxu0 %v1315
    %1382 = vmatprep.subr.mxu0 0.0
    %1383 = vmatpush1.msra.mxu0 %v1316
    %1384 = vmatprep.subr.mxu0 0.0
    %1385 = vmatpush1.msra.mxu0 %v1317
    %1386 = vmatprep.subr.mxu0 0.0
    %1387 = vmatpush1.msra.mxu0 %v1318
    %1388 = vmatprep.subr.mxu0 0.0
    %1389 = vmatpush1.msra.mxu0 %v1319
    %1390 = vmatprep.subr.mxu0 0.0
    %1391 = vmatpush1.msra.mxu0 %v1320
    %1392 = vmatprep.mubr.f32.mxu0 %v1288
    %1393 = vmatmul.mubr.f32.gmra.mrb[0].mxu0 %v1287
    %v1394 = vpop.f32.mrb[0].mxu0
    %v1395 = vadd.f32 %v1326, %v1394
    %v1396 = vpop.f32.mrb[0].mxu0
    %1397 = vdwg.mxu0
    %v1398 = vmax.f32 %v1395, 0.0
    %v1399 = vld [vmem:[%s10] sm:$0xff]
    %v1400 = vld [vmem:[%s10 + $0x8] sm:$0xff]
    %v1401 = vld [vmem:[%s10 + $0x10] sm:$0xff]
    %v1402 = vld [vmem:[%s10 + $0x18] sm:$0xff]
    %v1403 = vld [vmem:[%s10 + $0x20] sm:$0xff]
    %v1404 = vld [vmem:[%s10 + $0x28] sm:$0xff]
    %v1405 = vld [vmem:[%s10 + $0x30] sm:$0xff]
    %v1406 = vld [vmem:[%s10 + $0x38] sm:$0xff]
    %v1407 = vld [vmem:[%s10 + $0x40] sm:$0xff]
    %v1408 = vld [vmem:[%s10 + $0x48] sm:$0xff]
    %v1409 = vld [vmem:[%s10 + $0x50] sm:$0xff]
    %v1410 = vld [vmem:[%s10 + $0x58] sm:$0xff]
    %v1411 = vld [vmem:[%s10 + $0x60] sm:$0xff]
    %v1412 = vld [vmem:[%s10 + $0x68] sm:$0xff]
    %v1413 = vld [vmem:[%s10 + $0x70] sm:$0xff]
    %v1414 = vld [vmem:[%s10 + $0x78] sm:$0xff]
    %v1415 = vld [vmem:[%s11] sm:$0x1]
    %v1417 = vlaneseq
    %v1418 = vshrl.u32 %v1417, 7
    %v1419 = vsub.s32 0, %v1418
    %v1420 = vrot.slane %v1415, %v1419
    %1422 = vmatprep.subr.mxu0 0.0
    %1423 = vmatpush1.msra.mxu0 %v1399
    %1424 = vmatprep.subr.mxu0 0.0
    %1425 = vmatpush1.msra.mxu0 %v1400
    %1426 = vmatprep.subr.mxu0 0.0
    %1427 = vmatpush1.msra.mxu0 %v1401
    %1428 = vmatprep.subr.mxu0 0.0
    %1429 = vmatpush1.msra.mxu0 %v1402
    %1430 = vmatprep.subr.mxu0 0.0
    %1431 = vmatpush1.msra.mxu0 %v1403
    %1432 = vmatprep.subr.mxu0 0.0
    %1433 = vmatpush1.msra.mxu0 %v1404
    %1434 = vmatprep.subr.mxu0 0.0
    %1435 = vmatpush1.msra.mxu0 %v1405
    %1436 = vmatprep.subr.mxu0 0.0
    %1437 = vmatpush1.msra.mxu0 %v1406
    %1438 = vmatprep.subr.mxu0 0.0
    %1439 = vmatpush1.msra.mxu0 %v1407
    %1440 = vmatprep.subr.mxu0 0.0
    %1441 = vmatpush1.msra.mxu0 %v1408
    %1442 = vmatprep.subr.mxu0 0.0
    %1443 = vmatpush1.msra.mxu0 %v1409
    %1444 = vmatprep.subr.mxu0 0.0
    %1445 = vmatpush1.msra.mxu0 %v1410
    %1446 = vmatprep.subr.mxu0 0.0
    %1447 = vmatpush1.msra.mxu0 %v1411
    %1448 = vmatprep.subr.mxu0 0.0
    %1449 = vmatpush1.msra.mxu0 %v1412
    %1450 = vmatprep.subr.mxu0 0.0
    %1451 = vmatpush1.msra.mxu0 %v1413
    %1452 = vmatprep.subr.mxu0 0.0
    %1453 = vmatpush1.msra.mxu0 %v1414
    %1454 = vmatprep.subr.mxu0 0.0
    %1455 = vmatpush1.msra.mxu0 0.0
    %1456 = vmatprep.subr.mxu0 0.0
    %1457 = vmatpush1.msra.mxu0 0.0
    %1458 = vmatprep.subr.mxu0 0.0
    %1459 = vmatpush1.msra.mxu0 0.0
    %1460 = vmatprep.subr.mxu0 0.0
    %1461 = vmatpush1.msra.mxu0 0.0
    %1462 = vmatprep.subr.mxu0 0.0
    %1463 = vmatpush1.msra.mxu0 0.0
    %1464 = vmatprep.subr.mxu0 0.0
    %1465 = vmatpush1.msra.mxu0 0.0
    %1466 = vmatprep.subr.mxu0 0.0
    %1467 = vmatpush1.msra.mxu0 0.0
    %1468 = vmatprep.subr.mxu0 0.0
    %1469 = vmatpush1.msra.mxu0 0.0
    %1470 = vmatprep.subr.mxu0 0.0
    %1471 = vmatpush1.msra.mxu0 0.0
    %1472 = vmatprep.subr.mxu0 0.0
    %1473 = vmatpush1.msra.mxu0 0.0
    %1474 = vmatprep.subr.mxu0 0.0
    %1475 = vmatpush1.msra.mxu0 0.0
    %1476 = vmatprep.subr.mxu0 0.0
    %1477 = vmatpush1.msra.mxu0 0.0
    %1478 = vmatprep.subr.mxu0 0.0
    %1479 = vmatpush1.msra.mxu0 0.0
    %1480 = vmatprep.subr.mxu0 0.0
    %1481 = vmatpush1.msra.mxu0 0.0
    %1482 = vmatprep.subr.mxu0 0.0
    %1483 = vmatpush1.msra.mxu0 0.0
    %1484 = vmatprep.subr.mxu0 0.0
    %1485 = vmatpush1.msra.mxu0 0.0
    %1486 = vmatprep.mubr.f32.mxu0 0.0
    %1487 = vmatmul.mubr.f32.gmra.mrb[0].mxu0 %v1398
    %v1488 = vpop.f32.mrb[0].mxu0
    %v1489 = vadd.f32 %v1420, %v1488
    %v1490 = vpop.f32.mrb[0].mxu0
    %1491 = vdwg.mxu0
    %1492 = vst.msk [vmem:[#allocation7] sm:$0xff] %vm217, %v1489
    // Predicated region
    $region54: #{tpu_custom_call.1} parent=1 // pred_check
      _
    $region55: #{tpu_custom_call.1} parent=1 // pred_check_branch
      %1494 = sbr.rel (0) target = $region57
    $region56: #{tpu_custom_call.1} parent=1 // pred_region
      %s1496 = ssub.s32 128, 128
      %1497 = vsyncadd [#allocation6], %s1496
      %s1499 = sshll.u32 [#allocation7], 4
      %s1500 = int_to_ptr.vmem [resolvable:$true] %s1499
      %1502 = dma.vmem_to_hbm [thread:$0]  %s1500, 128, %s12, [#allocation6]
    $region57: #{tpu_custom_call.1} parent=1 // pred_fallthru
      _
    // Predicated region
    $region58: #{tpu_custom_call.1} parent=1 // pred_check
      _
    $region59: #{tpu_custom_call.1} parent=1 // pred_check_branch
      %1504 = sbr.rel (0) target = $region61
    $region60: #{tpu_custom_call.1} parent=1 // pred_region
      %1505 = dma.done [#allocation6], 128
    $region61: #{tpu_custom_call.1} parent=1 // pred_fallthru
      _
    %1506 = vsyncpa [#allocation5], 1
    %1507 = vsyncpa [#allocation6], 1

</llo_original>
